<compile_context>
chip_gen: v5e
topology: v5e:2x2
jax: 0.10.0
libtpu: 0.0.40
codegen_flags: <defaults>
</compile_context>

<pallas_src>
import functools

import jax
import jax.numpy as jnp
from jax.experimental import pallas as pl
from jax.experimental.pallas import tpu as pltpu


def _round_up(a, b):
    return (a + b - 1) // b * b


def _largest_tile(dim, target, quantum):
    """Largest multiple of `quantum` <= target that divides `dim`."""
    t = min(target, dim)
    t = (t // quantum) * quantum
    t = max(t, quantum)
    while t > quantum and dim % t != 0:
        t -= quantum
    return t


def _default_tile_config():
    """(tile_m, tile_h, vmem_limit_bytes) tuned per TPU generation."""
    try:
        kind = jax.devices()[0].device_kind.lower()
    except Exception:  # pragma: no cover - CPU/interpret fallback
        kind = ""
    if "v6" in kind:                       # v6e: 128 MiB physical VMEM
        return 1024, 512, 64 << 20
    if "v5 lite" in kind or "v5e" in kind or "v5lite" in kind:
        return 512, 512, 48 << 20          # v5e: raise the 16 MiB default limit
    # v7x (64 MiB physical VMEM) and unknown generations: stay conservative.
    return 512, 512, 48 << 20


def _cas_kernel(x_ref, w_ref, b_ref, wc_ref, feat_ref, out_ref, *, mag_col):
    """One (row-tile, H-tile) step: fused conv + ReLU + classifier + |feat|^2."""
    h = pl.program_id(1)

    @pl.when(h == 0)
    def _():
        out_ref[...] = jnp.zeros_like(out_ref)

    # Fused 3-tap Conv1d: [TM, 3F] @ [3F, TH] (bf16 operands, f32 accumulate).
    acc = jnp.dot(x_ref[...], w_ref[...], preferred_element_type=jnp.float32)
    acc = acc + b_ref[...]                       # bias [1, TH] broadcast
    feat = jnp.maximum(acc, 0.0)                 # ReLU
    feat_bf = feat.astype(jnp.bfloat16)
    feat_ref[...] = feat_bf                      # bf16 features writeback

    # 1x1 classifier conv contribution of this H tile (C padded to 128 lanes).
    cas_part = jnp.dot(feat_bf, wc_ref[...],
                       preferred_element_type=jnp.float32)    # [TM, Cpad]

    # Partial sum-of-squares for the L2 feature magnitude, folded into spare
    # lane `mag_col` of the lane-dense classifier slab (that column of wc is 0).
    ssq = jnp.sum(feat * feat, axis=-1, keepdims=True)         # [TM, 1]
    lane = jax.lax.broadcasted_iota(jnp.int32, cas_part.shape, 1)
    out_ref[...] += cas_part + jnp.where(lane == mag_col, ssq, 0.0)


def cas_module_pallas(x, w_cat, bias, wc, *, tm=None, th=None, vmem_limit=None):
    """x: [B, T, F] f32.

    Returns (features [B,T,H] bf16, cas [B,T,C] f32, feat_magnitudes [B,T] f32).
    """
    B, T, F = x.shape
    H = w_cat.shape[1]
    C = wc.shape[1]

    d_tm, d_th, d_vmem = _default_tile_config()
    tm = tm or d_tm
    th = th or d_th
    vmem_limit = vmem_limit or d_vmem

    # Pad hidden dim to a multiple of 128 (defensive; H=2048 needs no pad).
    # Zero-padded hidden units give ReLU(0)=0 and contribute nothing.
    h_pad = _round_up(H, 128)
    w_cat_p = w_cat.astype(jnp.bfloat16)
    bias_p = bias.astype(jnp.float32)
    wc_p = wc.astype(jnp.bfloat16)
    if h_pad != H:
        w_cat_p = jnp.pad(w_cat_p, ((0, 0), (0, h_pad - H)))
        bias_p = jnp.pad(bias_p, ((0, 0), (0, h_pad - H)))
        wc_p = jnp.pad(wc_p, ((0, h_pad - H), (0, 0)))

    c_pad = max(128, _round_up(C + 1, 128))
    mag_col = C
    # Classifier weight padded to a lane-dense 128-wide slab; padded columns
    # (including the magnitude lane) are zero.
    wc_p = jnp.pad(wc_p, ((0, 0), (0, c_pad - C)))

    # Time shifts (zero padded at the sequence edges) built in the wrapper so
    # the kernel performs one long-K matmul per row tile.
    # TODO(synk): xcat materializes a [B,T,3F] copy of x in HBM; acceptable
    # because weight traffic dominates at production F=H=2048.
    x_prev = jnp.pad(x, ((0, 0), (1, 0), (0, 0)))[:, :T, :]
    x_next = jnp.pad(x, ((0, 0), (0, 1), (0, 0)))[:, 1:, :]
    xcat = jnp.concatenate([x_prev, x, x_next], axis=-1).astype(jnp.bfloat16)

    M = B * T
    tile_m = min(tm, _round_up(M, 8))
    # Megacore: make sure the "parallel" m axis has >= 2 tiles when possible so
    # both v7x TensorCores are used (also helps pipelining on 1-TC chips).
    if M > 8 and _round_up(M, tile_m) // tile_m < 2:
        tile_m = _round_up((M + 1) // 2, 8)
    m_pad = _round_up(M, tile_m)

    xflat = xcat.reshape(M, 3 * F)
    if m_pad != M:
        xflat = jnp.pad(xflat, ((0, m_pad - M), (0, 0)))

    tile_h = _largest_tile(h_pad, th, 128)
    num_m = m_pad // tile_m
    num_h = h_pad // tile_h

    kernel = functools.partial(_cas_kernel, mag_col=mag_col)

    grid_spec = pltpu.PrefetchScalarGridSpec(
        num_scalar_prefetch=0,
        grid=(num_m, num_h),
        in_specs=[
            pl.BlockSpec((tile_m, 3 * F), lambda m, h: (m, 0)),   # x rows
            pl.BlockSpec((3 * F, tile_h), lambda m, h: (0, h)),   # fused conv w
            pl.BlockSpec((1, tile_h), lambda m, h: (0, h)),       # conv bias
            pl.BlockSpec((tile_h, c_pad), lambda m, h: (h, 0)),   # classifier w
        ],
        out_specs=[
            pl.BlockSpec((tile_m, tile_h), lambda m, h: (m, h)),  # features
            pl.BlockSpec((tile_m, c_pad), lambda m, h: (m, 0)),   # cas + |.|^2
        ],
    )

    # Advisory cost so XLA schedules the surrounding graph around this call.
    flops = 2.0 * m_pad * (3 * F) * h_pad + 2.0 * m_pad * h_pad * c_pad
    bytes_accessed = (
        m_pad * 3 * F * 2                      # x (bf16)
        + num_m * 3 * F * h_pad * 2            # fused conv weights re-streamed
        + num_m * h_pad * 4                    # bias
        + num_m * h_pad * c_pad * 2            # classifier weights
        + m_pad * h_pad * 2                    # features out (bf16)
        + m_pad * c_pad * 4                    # cas slab out (f32)
    )
    cost = pl.CostEstimate(flops=int(flops), transcendentals=0,
                           bytes_accessed=int(bytes_accessed))

    feat_flat, comb = pl.pallas_call(
        kernel,
        out_shape=(
            jax.ShapeDtypeStruct((m_pad, h_pad), jnp.bfloat16),
            jax.ShapeDtypeStruct((m_pad, c_pad), jnp.float32),
        ),
        grid_spec=grid_spec,
        compiler_params=pltpu.CompilerParams(
            dimension_semantics=("parallel", "arbitrary"),
            vmem_limit_bytes=vmem_limit),
        cost_estimate=cost,
    )(xflat, w_cat_p, bias_p, wc_p)

    features = feat_flat[:M, :H].reshape(B, T, H)
    cas = comb[:M, :C].reshape(B, T, C)
    feat_magnitudes = jnp.sqrt(comb[:M, mag_col]).reshape(B, T)
    return features, cas, feat_magnitudes


@functools.partial(jax.jit, static_argnames=("r_act", "r_bkg"))
def model_forward(x, params, r_act, r_bkg):
    """Replicates Model.forward (eval mode). x: [B, T, len_feature]."""
    B, T, _ = x.shape
    k_act = T // r_act
    k_bkg = T // r_bkg

    features, cas, feat_magnitudes = cas_module_pallas(
        x, params["w_cat"], params["bias"], params["wc"])

    # Dropout(p=0.7) on an all-ones select mask -> identity in eval mode.
    feat_magnitudes_rev = (jnp.max(feat_magnitudes, axis=1, keepdims=True)
                           - feat_magnitudes)

    # TODO(synk): descending sort / top-k selection & gather have no clean
    # Pallas equivalent; done with jax.lax.top_k / take_along_axis in plain JAX.
    _, idx_act = jax.lax.top_k(feat_magnitudes, k_act)       # [B, k_act]
    _, idx_bkg = jax.lax.top_k(feat_magnitudes_rev, k_bkg)   # [B, k_bkg]

    H = features.shape[2]
    C = cas.shape[2]
    feat_act = jnp.take_along_axis(
        features, jnp.broadcast_to(idx_act[:, :, None], (B, k_act, H)), axis=1)
    feat_bkg = jnp.take_along_axis(
        features, jnp.broadcast_to(idx_bkg[:, :, None], (B, k_bkg, H)), axis=1)

    # Per-class top-k over time (replaces full descending sort of cas).
    topk_vals, _ = jax.lax.top_k(jnp.swapaxes(cas, 1, 2), k_act)  # [B, C, k_act]
    score_act = jnp.mean(topk_vals, axis=2)                       # [B, C]

    cas_bkg = jnp.take_along_axis(
        cas, jnp.broadcast_to(idx_bkg[:, :, None], (B, k_bkg, C)), axis=1)
    score_bkg = jnp.mean(cas_bkg, axis=1)                         # [B, C]

    score_act = jax.nn.softmax(score_act, axis=1)
    score_bkg = jax.nn.softmax(score_bkg, axis=1)
    cas_softmax = jax.nn.softmax(cas, axis=2)

    return score_act, score_bkg, feat_act, feat_bkg, features, cas_softmax


def init_params(key, len_feature, num_classes, hidden=2048):
    """Deterministic synthetic parameters matching the PyTorch module shapes."""
    k1, k2, k3 = jax.random.split(key, 3)
    # PyTorch Conv1d weight: [out=2048, in=len_feature, k=3]
    w_conv = jax.random.normal(k1, (hidden, len_feature, 3), jnp.float32) * 0.02
    b_conv = jax.random.normal(k2, (hidden,), jnp.float32) * 0.01
    # classifier Conv1d weight: [num_classes, 2048, 1], no bias
    w_cls = jax.random.normal(k3, (num_classes, hidden, 1), jnp.float32) * 0.02
    # Fused conv weight: rows [0:F] multiply x[t-1], [F:2F] x[t], [2F:3F] x[t+1]
    w_cat = jnp.concatenate(
        [jnp.transpose(w_conv[:, :, 0]),
         jnp.transpose(w_conv[:, :, 1]),
         jnp.transpose(w_conv[:, :, 2])], axis=0).astype(jnp.bfloat16)  # [3F,H]
    return {
        "w_cat": w_cat,                                              # [3F, H] bf16
        "bias": b_conv.reshape(1, hidden),                           # [1, H] f32
        "wc": jnp.transpose(w_cls[:, :, 0]).astype(jnp.bfloat16),    # [H, C] bf16
    }


if __name__ == "__main__":
    B, T, F = 2, 16, 128          # batch, num_segments, len_feature
    num_classes = 8
    r_act, r_bkg = 4, 8           # k_act = 4, k_bkg = 2

    key = jax.random.PRNGKey(0)
    kx, kp = jax.random.split(key)
    x = jax.random.normal(kx, (B, T, F), jnp.float32)
    params = init_params(kp, F, num_classes)

    outs = model_forward(x, params, r_act, r_bkg)
    outs = jax.block_until_ready(outs)

    score_act, score_bkg, feat_act, feat_bkg, features, cas_softmax = outs
    assert score_act.shape == (B, num_classes)
    assert score_bkg.shape == (B, num_classes)
    assert feat_act.shape == (B, T // r_act, 2048)
    assert feat_bkg.shape == (B, T // r_bkg, 2048)
    assert features.shape == (B, T, 2048)
    assert cas_softmax.shape == (B, T, num_classes)
    print("KERNEL_OK")
</pallas_src>

<mosaic_0001>
module attributes {stable_mosaic.version = 11 : i64} {
  func.func @_cas_kernel(%arg0: i32, %arg1: i32, %arg2: memref<16x384xbf16, #tpu.memory_space<vmem>>, %arg3: memref<384x512xbf16, #tpu.memory_space<vmem>>, %arg4: memref<1x512xf32, #tpu.memory_space<vmem>>, %arg5: memref<512x128xbf16, #tpu.memory_space<vmem>>, %arg6: memref<16x512xbf16, #tpu.memory_space<vmem>>, %arg7: memref<16x128xf32, #tpu.memory_space<vmem>>) attributes {dimension_semantics = [#tpu.dimension_semantics<parallel>, #tpu.dimension_semantics<arbitrary>], iteration_bounds = array<i64: 2, 4>, scalar_prefetch = 0 : i64, scratch_operands = 0 : i64, tpu.core_type = #tpu.core_type<tc>, window_params = [{transform_indices = @transform_0, window_bounds = array<i64: 16, 384>}, {transform_indices = @transform_1, window_bounds = array<i64: 384, 512>}, {transform_indices = @transform_2, window_bounds = array<i64: 1, 512>}, {transform_indices = @transform_3, window_bounds = array<i64: 512, 128>}, {transform_indices = @transform_4, window_bounds = array<i64: 16, 512>}, {transform_indices = @transform_5, window_bounds = array<i64: 16, 128>}]} {
    %c0_i32 = arith.constant 0 : i32
    %0 = arith.cmpi eq, %arg1, %c0_i32 : i32
    %1 = arith.extui %0 : i1 to i32
    %c0_i32_0 = arith.constant 0 : i32
    %2 = arith.cmpi ne, %1, %c0_i32_0 : i32
    scf.if %2 {
      %cst_18 = arith.constant 0.000000e+00 : f32
      %29 = vector.broadcast %cst_18 : f32 to vector<16x128xf32>
      %c0_19 = arith.constant 0 : index
      %c0_20 = arith.constant 0 : index
      %30 = vector.load %arg7[%c0_19, %c0_20] : memref<16x128xf32, #tpu.memory_space<vmem>>, vector<16x128xf32>
      tpu.vector_store %arg7[%c0_19, %c0_20], %29 {strides = array<i32>} : memref<16x128xf32, #tpu.memory_space<vmem>>, vector<16x128xf32>,
    } else {
    }
    %c0 = arith.constant 0 : index
    %c0_1 = arith.constant 0 : index
    %3 = vector.load %arg2[%c0, %c0_1] : memref<16x384xbf16, #tpu.memory_space<vmem>>, vector<16x384xbf16>
    %c0_2 = arith.constant 0 : index
    %c0_3 = arith.constant 0 : index
    %4 = vector.load %arg3[%c0_2, %c0_3] : memref<384x512xbf16, #tpu.memory_space<vmem>>, vector<384x512xbf16>
    %cst = arith.constant dense<0.000000e+00> : vector<16x512xf32>
    %5 = tpu.matmul %3, %4, %cst {dimension_numbers = #tpu.dot_dimension_numbers<[1], [0], [0], [1], [0, 0, 1, 1], [], []>} : vector<16x384xbf16>, vector<384x512xbf16>, vector<16x512xf32> -> vector<16x512xf32>
    %c0_4 = arith.constant 0 : index
    %c0_5 = arith.constant 0 : index
    %6 = vector.load %arg4[%c0_4, %c0_5] : memref<1x512xf32, #tpu.memory_space<vmem>>, vector<1x512xf32>
    %7 = vector.broadcast %6 : vector<1x512xf32> to vector<16x512xf32>
    %8 = arith.addf %5, %7 : vector<16x512xf32>
    %cst_6 = arith.constant 0.000000e+00 : f32
    %9 = vector.broadcast %cst_6 : f32 to vector<16x512xf32>
    %10 = arith.maximumf %8, %9 : vector<16x512xf32>
    %11 = arith.truncf %10 : vector<16x512xf32> to vector<16x512xbf16>
    %c0_7 = arith.constant 0 : index
    %c0_8 = arith.constant 0 : index
    %12 = vector.load %arg6[%c0_7, %c0_8] : memref<16x512xbf16, #tpu.memory_space<vmem>>, vector<16x512xbf16>
    tpu.vector_store %arg6[%c0_7, %c0_8], %11 {strides = array<i32>} : memref<16x512xbf16, #tpu.memory_space<vmem>>, vector<16x512xbf16>,
    %c0_9 = arith.constant 0 : index
    %c0_10 = arith.constant 0 : index
    %13 = vector.load %arg5[%c0_9, %c0_10] : memref<512x128xbf16, #tpu.memory_space<vmem>>, vector<512x128xbf16>
    %cst_11 = arith.constant dense<0.000000e+00> : vector<16x128xf32>
    %14 = tpu.matmul %11, %13, %cst_11 {dimension_numbers = #tpu.dot_dimension_numbers<[1], [0], [0], [1], [0, 0, 1, 1], [], []>} : vector<16x512xbf16>, vector<512x128xbf16>, vector<16x128xf32> -> vector<16x128xf32>
    %15 = arith.mulf %10, %10 : vector<16x512xf32>
    %cst_12 = arith.constant dense<0.000000e+00> : vector<16xf32>
    %16 = vector.multi_reduction <add>, %15, %cst_12 [1] : vector<16x512xf32> to vector<16xf32>
    %17 = vector.shape_cast %16 : vector<16xf32> to vector<16x1xf32>
    %18 = tpu.iota {dimensions = array<i32: 1>} : vector<16x128xi32>
    %c0_13 = arith.constant 0 : index
    %c0_14 = arith.constant 0 : index
    %19 = vector.load %arg7[%c0_13, %c0_14] : memref<16x128xf32, #tpu.memory_space<vmem>>, vector<16x128xf32>
    %c8_i32 = arith.constant 8 : i32
    %20 = vector.broadcast %c8_i32 : i32 to vector<16x128xi32>
    %21 = arith.cmpi eq, %18, %20 : vector<16x128xi32>
    %cst_15 = arith.constant 0.000000e+00 : f32
    %22 = vector.shape_cast %17 : vector<16x1xf32> to vector<16x1xf32>
    %23 = vector.broadcast %22 : vector<16x1xf32> to vector<16x128xf32>
    %24 = vector.broadcast %cst_15 : f32 to vector<16x128xf32>
    %25 = arith.select %21, %23, %24 : vector<16x128xi1>, vector<16x128xf32>
    %26 = arith.addf %14, %25 : vector<16x128xf32>
    %27 = arith.addf %19, %26 : vector<16x128xf32>
    %c0_16 = arith.constant 0 : index
    %c0_17 = arith.constant 0 : index
    %28 = vector.load %arg7[%c0_16, %c0_17] : memref<16x128xf32, #tpu.memory_space<vmem>>, vector<16x128xf32>
    tpu.vector_store %arg7[%c0_16, %c0_17], %27 {strides = array<i32>} : memref<16x128xf32, #tpu.memory_space<vmem>>, vector<16x128xf32>,
    return
  }
  func.func @transform_0(%arg0: i32, %arg1: i32) -> (i32, i32) {
    %c0_i32 = arith.constant 0 : i32
    %c0_i32_0 = arith.constant 0 : i32
    return %arg0, %c0_i32 : i32, i32
  }
  func.func @transform_1(%arg0: i32, %arg1: i32) -> (i32, i32) {
    %c0_i32 = arith.constant 0 : i32
    %c0_i32_0 = arith.constant 0 : i32
    return %c0_i32, %arg1 : i32, i32
  }
  func.func @transform_2(%arg0: i32, %arg1: i32) -> (i32, i32) {
    %c0_i32 = arith.constant 0 : i32
    %c0_i32_0 = arith.constant 0 : i32
    return %c0_i32, %arg1 : i32, i32
  }
  func.func @transform_3(%arg0: i32, %arg1: i32) -> (i32, i32) {
    %c0_i32 = arith.constant 0 : i32
    %c0_i32_0 = arith.constant 0 : i32
    return %arg1, %c0_i32 : i32, i32
  }
  func.func @transform_4(%arg0: i32, %arg1: i32) -> (i32, i32) {
    %c0_i32 = arith.constant 0 : i32
    return %arg0, %arg1 : i32, i32
  }
  func.func @transform_5(%arg0: i32, %arg1: i32) -> (i32, i32) {
    %c0_i32 = arith.constant 0 : i32
    %c0_i32_0 = arith.constant 0 : i32
    return %arg0, %c0_i32 : i32, i32
  }
}

</mosaic_0001>

<llo_original>
// kernel: model_forward.1
$region0: #{model_forward.1}
  #allocation0 [shape = 'u32[]', space=smem, size = 0x4, offset = 0x4, fixed_abs, tag = 'smem constant byte address 0x4 - core index']
  #allocation1 [shape = 'u32[72,128]{1,0:T(1,128)}', space=vmem, size = 0x9000, scoped, tag = 'internal scratch']
  %s0 = inlined_call_operand.vmem [shape: bf16[32,384], index: 0, kind: input, shape index: {}]
  %s1 = inlined_call_operand.vmem [shape: bf16[384,2048], index: 1, kind: input, shape index: {}]
  %s2 = inlined_call_operand.vmem [shape: f32[1,2048], index: 2, kind: input, shape index: {}]
  %s3 = inlined_call_operand.vmem [shape: bf16[2048,128], index: 3, kind: input, shape index: {}]
  %s4 = inlined_call_operand.vmem [shape: bf16[32,2048], index: 4, kind: output, shape index: {0}]
  %s5 = inlined_call_operand.vmem [shape: f32[32,128], index: 5, kind: output, shape index: {1}]
  %6 = xla_tuple %s4, %s5
  %s7 = sld [smem:[#allocation0]]
  $region103: #{model_forward.1} parent=0
    _
  %s9 = ssub.s32 1, %s7
  %s10 = scalar_select 0, %s9, %s7
  $region1: #{model_forward.1} parent=0
    #allocation2 [shape = 'u8[786432]{0}', space=vmem, size = 0xc0000, scoped, tag = 'input window, operand 1']
    #allocation3 [shape = 'u8[32768]{0}', space=vmem, size = 0x8000, scoped, tag = 'output window, operand 0']
    loop: start=0, step=1, limit=10
    $region2: #{model_forward.1} parent=1 // loop_pre_header
      _
    $region3: #{model_forward.1} parent=1 // loop_header
      %s12 = sphi 0, %s16
      %p13 = scmp.ge.s32.totalorder %s12, 10
      %s19 = sphi 0, %s31
      %s20 = sphi 0, %s27
      %s21 = sphi 0, %s19
      %s22 = sphi 0, %s20
      %s23 = sphi 0, %s21
      %s24 = sphi 0, %s22
      %s34 = sphi 0, %s36
      %s37 = sphi 0, %s34
      %s38 = sphi 0, %s37
      %s54 = sphi 0, %s38
      %s60 = sphi 0, %s62
      %s63 = sphi 0, %s60
      %s64 = sphi 0, %s63
      %s80 = sphi 0, %s64
      %s86 = sphi 0, %s88
      %s89 = sphi 0, %s86
      %s90 = sphi 0, %s89
      %s106 = sphi 0, %s90
      %s112 = sphi 0, %s114
      %s115 = sphi 0, %s112
      %s116 = sphi 0, %s115
      %s132 = sphi 0, %s116
      %s140 = sphi 0, %s142
      %s143 = sphi 0, %s140
      %s144 = sphi 0, %s143
      %s160 = sphi 0, %s144
      %s166 = sphi 0, %s168
      %s169 = sphi 0, %s166
      %s170 = sphi 0, %s169
      %s186 = sphi 0, %s170
    $region4: #{model_forward.1} parent=1 // loop_header_branch
      %15 = sbr.rel (%p13) target = $region8
    $region5: #{model_forward.1} parent=1 // loop_body
      %s17 = ssub.s32 %s12, 1
      %s18 = ssub.s32 %s12, 2
      %s25 = sadd.s32 1, %s20
      %p26 = scmp.ge.s32.totalorder %s25, 4
      %s27 = scalar_select %p26, 0, %s25
      %s28 = sadd.s32 1, %s19
      %s29 = scalar_select %p26, %s28, %s19
      %p30 = scmp.ge.s32.totalorder %s29, 2
      %s31 = scalar_select %p30, 0, %s29
      %s32 = ssub.s32 %s19, %s31
      %p33 = scmp.eq.s32.totalorder %s32, 0
      %s35 = sadd.s32 %s34, 1
      %s36 = scalar_select %p33, %s34, %s35
      %p39 = pneg %p33
      %p40 = scmp.eq.s32.totalorder %s12, 7
      %p41 = por %p39, %p40
      %p42 = scmp.ne.s32.totalorder %s34, %s37
      %p43 = scmp.eq.s32.totalorder %s12, 0
      %p44 = por %p42, %p43
      %p45 = scmp.ne.s32.totalorder %s34, %s37
      %p46 = scmp.eq.s32.totalorder %s17, 7
      %p47 = por %p45, %p46
      %p48 = scmp.ne.s32.totalorder %s37, %s38
      %p49 = scmp.eq.s32.totalorder %s17, 0
      %p50 = por %p48, %p49
      %p51 = scmp.ne.s32.totalorder %s37, %s38
      %p52 = scmp.eq.s32.totalorder %s18, 7
      %p53 = por %p51, %p52
      %p55 = scmp.ne.s32.totalorder %s38, %s54
      %p56 = scmp.eq.s32.totalorder %s18, 0
      %p57 = por %p55, %p56
      %s58 = ssub.s32 %s20, %s27
      %p59 = scmp.eq.s32.totalorder %s58, 0
      %s61 = sadd.s32 %s60, 1
      %s62 = scalar_select %p59, %s60, %s61
      %p65 = pneg %p59
      %p66 = scmp.eq.s32.totalorder %s12, 7
      %p67 = por %p65, %p66
      %p68 = scmp.ne.s32.totalorder %s60, %s63
      %p69 = scmp.eq.s32.totalorder %s12, 0
      %p70 = por %p68, %p69
      %p71 = scmp.ne.s32.totalorder %s60, %s63
      %p72 = scmp.eq.s32.totalorder %s17, 7
      %p73 = por %p71, %p72
      %p74 = scmp.ne.s32.totalorder %s63, %s64
      %p75 = scmp.eq.s32.totalorder %s17, 0
      %p76 = por %p74, %p75
      %p77 = scmp.ne.s32.totalorder %s63, %s64
      %p78 = scmp.eq.s32.totalorder %s18, 7
      %p79 = por %p77, %p78
      %p81 = scmp.ne.s32.totalorder %s64, %s80
      %p82 = scmp.eq.s32.totalorder %s18, 0
      %p83 = por %p81, %p82
      %s84 = ssub.s32 %s20, %s27
      %p85 = scmp.eq.s32.totalorder %s84, 0
      %s87 = sadd.s32 %s86, 1
      %s88 = scalar_select %p85, %s86, %s87
      %p91 = pneg %p85
      %p92 = scmp.eq.s32.totalorder %s12, 7
      %p93 = por %p91, %p92
      %p94 = scmp.ne.s32.totalorder %s86, %s89
      %p95 = scmp.eq.s32.totalorder %s12, 0
      %p96 = por %p94, %p95
      %p97 = scmp.ne.s32.totalorder %s86, %s89
      %p98 = scmp.eq.s32.totalorder %s17, 7
      %p99 = por %p97, %p98
      %p100 = scmp.ne.s32.totalorder %s89, %s90
      %p101 = scmp.eq.s32.totalorder %s17, 0
      %p102 = por %p100, %p101
      %p103 = scmp.ne.s32.totalorder %s89, %s90
      %p104 = scmp.eq.s32.totalorder %s18, 7
      %p105 = por %p103, %p104
      %p107 = scmp.ne.s32.totalorder %s90, %s106
      %p108 = scmp.eq.s32.totalorder %s18, 0
      %p109 = por %p107, %p108
      %s110 = ssub.s32 %s20, %s27
      %p111 = scmp.eq.s32.totalorder %s110, 0
      %s113 = sadd.s32 %s112, 1
      %s114 = scalar_select %p111, %s112, %s113
      %p117 = pneg %p111
      %p118 = scmp.eq.s32.totalorder %s12, 7
      %p119 = por %p117, %p118
      %p120 = scmp.ne.s32.totalorder %s112, %s115
      %p121 = scmp.eq.s32.totalorder %s12, 0
      %p122 = por %p120, %p121
      %p123 = scmp.ne.s32.totalorder %s112, %s115
      %p124 = scmp.eq.s32.totalorder %s17, 7
      %p125 = por %p123, %p124
      %p126 = scmp.ne.s32.totalorder %s115, %s116
      %p127 = scmp.eq.s32.totalorder %s17, 0
      %p128 = por %p126, %p127
      %p129 = scmp.ne.s32.totalorder %s115, %s116
      %p130 = scmp.eq.s32.totalorder %s18, 7
      %p131 = por %p129, %p130
      %p133 = scmp.ne.s32.totalorder %s116, %s132
      %p134 = scmp.eq.s32.totalorder %s18, 0
      %p135 = por %p133, %p134
      %s136 = ssub.s32 %s19, %s31
      %s137 = ssub.s32 %s20, %s27
      %s138 = sor.u32 %s136, %s137
      %p139 = scmp.eq.s32.totalorder %s138, 0
      %s141 = sadd.s32 %s140, 1
      %s142 = scalar_select %p139, %s140, %s141
      %p145 = pneg %p139
      %p146 = scmp.eq.s32.totalorder %s12, 7
      %p147 = por %p145, %p146
      %p148 = scmp.ne.s32.totalorder %s140, %s143
      %p149 = scmp.eq.s32.totalorder %s12, 0
      %p150 = por %p148, %p149
      %p151 = scmp.ne.s32.totalorder %s140, %s143
      %p152 = scmp.eq.s32.totalorder %s17, 7
      %p153 = por %p151, %p152
      %p154 = scmp.ne.s32.totalorder %s143, %s144
      %p155 = scmp.eq.s32.totalorder %s17, 0
      %p156 = por %p154, %p155
      %p157 = scmp.ne.s32.totalorder %s143, %s144
      %p158 = scmp.eq.s32.totalorder %s18, 7
      %p159 = por %p157, %p158
      %p161 = scmp.ne.s32.totalorder %s144, %s160
      %p162 = scmp.eq.s32.totalorder %s18, 0
      %p163 = por %p161, %p162
      %s164 = ssub.s32 %s19, %s31
      %p165 = scmp.eq.s32.totalorder %s164, 0
      %s167 = sadd.s32 %s166, 1
      %s168 = scalar_select %p165, %s166, %s167
      %p171 = pneg %p165
      %p172 = scmp.eq.s32.totalorder %s12, 7
      %p173 = por %p171, %p172
      %p174 = scmp.ne.s32.totalorder %s166, %s169
      %p175 = scmp.eq.s32.totalorder %s12, 0
      %p176 = por %p174, %p175
      %p177 = scmp.ne.s32.totalorder %s166, %s169
      %p178 = scmp.eq.s32.totalorder %s17, 7
      %p179 = por %p177, %p178
      %p180 = scmp.ne.s32.totalorder %s169, %s170
      %p181 = scmp.eq.s32.totalorder %s17, 0
      %p182 = por %p180, %p181
      %p183 = scmp.ne.s32.totalorder %s169, %s170
      %p184 = scmp.eq.s32.totalorder %s18, 7
      %p185 = por %p183, %p184
      %p187 = scmp.ne.s32.totalorder %s170, %s186
      %p188 = scmp.eq.s32.totalorder %s18, 0
      %p189 = por %p187, %p188
      %p190 = scmp.le.s32.totalorder 1, %s12
      %p191 = scmp.lt.s32.totalorder %s12, 9
      %p192 = pnand %p190, %p191
      %p193 = pneg %p192
      // Predicated region
      $region9: #{model_forward.1} parent=5 // pred_check
        _
      $region10: #{model_forward.1} parent=5 // pred_check_branch
        %195 = sbr.rel (%p192) target = $region12
      $region11: #{model_forward.1} parent=5 // pred_region
        %s196 = ssub.s32 %s12, 1
      $region12: #{model_forward.1} parent=5 // pred_fallthru
        _
      %p197 = scmp.lt.s32.totalorder %s12, 8
      // Predicated region
      $region13: #{model_forward.1} parent=5 // pred_check
        %p198 = pneg %p197
      $region14: #{model_forward.1} parent=5 // pred_check_branch
        %200 = sbr.rel (%p198) target = $region16
      $region15: #{model_forward.1} parent=5 // pred_region
        // Predicated region
        $region17: #{model_forward.1} parent=15 // pred_check
          %p201 = pneg %p44
        $region18: #{model_forward.1} parent=15 // pred_check_branch
          %203 = sbr.rel (%p201) target = $region20
        $region19: #{model_forward.1} parent=15 // pred_region
          %s204 = smul.u32 2, %s19
          %p205 = scmp.lt.s32.totalorder %s204, 3
          %s206 = scalar_select %p205, %s204, 3
          %s207 = smul.addr %s206, 3
          %s208 = smul.addr %s207, 4
          %s209 = scalar_lea.vmem %s0, %s208
          %s210 = smul.u32 2, %s19
        $region20: #{model_forward.1} parent=15 // pred_fallthru
          _
        // Predicated region
        $region21: #{model_forward.1} parent=15 // pred_check
          %p211 = pneg %p70
        $region22: #{model_forward.1} parent=15 // pred_check_branch
          %213 = sbr.rel (%p211) target = $region24
        $region23: #{model_forward.1} parent=15 // pred_region
          %s214 = sand.u32 %s60, 1
          %s215 = sand.u32 %s60, 1
          %s216 = smul.addr %s215, 768
          %s217 = scalar_lea.vmem [#allocation2], %s216
          %s218 = smul.u32 4, %s20
          %s219 = smul.addr %s218, 4
          %s220 = scalar_lea.vmem %s1, %s219
          // Predicated region
          $region25: #{model_forward.1} parent=23 // pred_check
            _
          $region26: #{model_forward.1} parent=23 // pred_check_branch
            %222 = sbr.rel (0) target = $region28
          $region27: #{model_forward.1} parent=23 // pred_region
            // Predicated region
            $region29: #{model_forward.1} parent=27 // pred_check
              _
            $region30: #{model_forward.1} parent=27 // pred_check_branch
              %224 = sbr.rel (0) target = $region32
            $region31: #{model_forward.1} parent=27 // pred_region
              loop: start=0, step=1, limit=1
              $region33: #{model_forward.1} parent=31 // loop_pre_header
                _
              $region34: #{model_forward.1} parent=31 // loop_header
                %s226 = sphi 0, %s230
                %p227 = scmp.ge.s32.totalorder %s226, 1
                %s231 = sphi %s220, %s220
                %s232 = sphi %s217, %s217
              $region35: #{model_forward.1} parent=31 // loop_header_branch
                %229 = sbr.rel (%p227) target = $region39
              $region36: #{model_forward.1} parent=31 // loop_body
                %v233 = vld [vmem:[%s231] sm:$0xff]
                %234 = vst [vmem:[%s232] sm:$0xff] %v233
                %v235 = vld [vmem:[%s231 + $0x8] sm:$0xff]
                %236 = vst [vmem:[%s232 + $0x8] sm:$0xff] %v235
                %v237 = vld [vmem:[%s231 + $0x40] sm:$0xff]
                %238 = vst [vmem:[%s232 + $0x10] sm:$0xff] %v237
                %v239 = vld [vmem:[%s231 + $0x48] sm:$0xff]
                %240 = vst [vmem:[%s232 + $0x18] sm:$0xff] %v239
                %v241 = vld [vmem:[%s231 + $0x80] sm:$0xff]
                %242 = vst [vmem:[%s232 + $0x20] sm:$0xff] %v241
                %v243 = vld [vmem:[%s231 + $0x88] sm:$0xff]
                %244 = vst [vmem:[%s232 + $0x28] sm:$0xff] %v243
                %v245 = vld [vmem:[%s231 + $0xc0] sm:$0xff]
                %246 = vst [vmem:[%s232 + $0x30] sm:$0xff] %v245
                %v247 = vld [vmem:[%s231 + $0xc8] sm:$0xff]
                %248 = vst [vmem:[%s232 + $0x38] sm:$0xff] %v247
                %v249 = vld [vmem:[%s231 + $0x100] sm:$0xff]
                %250 = vst [vmem:[%s232 + $0x40] sm:$0xff] %v249
                %v251 = vld [vmem:[%s231 + $0x108] sm:$0xff]
                %252 = vst [vmem:[%s232 + $0x48] sm:$0xff] %v251
                %v253 = vld [vmem:[%s231 + $0x140] sm:$0xff]
                %254 = vst [vmem:[%s232 + $0x50] sm:$0xff] %v253
                %v255 = vld [vmem:[%s231 + $0x148] sm:$0xff]
                %256 = vst [vmem:[%s232 + $0x58] sm:$0xff] %v255
                %v257 = vld [vmem:[%s231 + $0x180] sm:$0xff]
                %258 = vst [vmem:[%s232 + $0x60] sm:$0xff] %v257
                %v259 = vld [vmem:[%s231 + $0x188] sm:$0xff]
                %260 = vst [vmem:[%s232 + $0x68] sm:$0xff] %v259
                %v261 = vld [vmem:[%s231 + $0x1c0] sm:$0xff]
                %262 = vst [vmem:[%s232 + $0x70] sm:$0xff] %v261
                %v263 = vld [vmem:[%s231 + $0x1c8] sm:$0xff]
                %264 = vst [vmem:[%s232 + $0x78] sm:$0xff] %v263
                %v265 = vld [vmem:[%s231 + $0x200] sm:$0xff]
                %266 = vst [vmem:[%s232 + $0x80] sm:$0xff] %v265
                %v267 = vld [vmem:[%s231 + $0x208] sm:$0xff]
                %268 = vst [vmem:[%s232 + $0x88] sm:$0xff] %v267
                %v269 = vld [vmem:[%s231 + $0x240] sm:$0xff]
                %270 = vst [vmem:[%s232 + $0x90] sm:$0xff] %v269
                %v271 = vld [vmem:[%s231 + $0x248] sm:$0xff]
                %272 = vst [vmem:[%s232 + $0x98] sm:$0xff] %v271
                %v273 = vld [vmem:[%s231 + $0x280] sm:$0xff]
                %274 = vst [vmem:[%s232 + $0xa0] sm:$0xff] %v273
                %v275 = vld [vmem:[%s231 + $0x288] sm:$0xff]
                %276 = vst [vmem:[%s232 + $0xa8] sm:$0xff] %v275
                %v277 = vld [vmem:[%s231 + $0x2c0] sm:$0xff]
                %278 = vst [vmem:[%s232 + $0xb0] sm:$0xff] %v277
                %v279 = vld [vmem:[%s231 + $0x2c8] sm:$0xff]
                %280 = vst [vmem:[%s232 + $0xb8] sm:$0xff] %v279
                %v281 = vld [vmem:[%s231 + $0x300] sm:$0xff]
                %282 = vst [vmem:[%s232 + $0xc0] sm:$0xff] %v281
                %v283 = vld [vmem:[%s231 + $0x308] sm:$0xff]
                %284 = vst [vmem:[%s232 + $0xc8] sm:$0xff] %v283
                %v285 = vld [vmem:[%s231 + $0x340] sm:$0xff]
                %286 = vst [vmem:[%s232 + $0xd0] sm:$0xff] %v285
                %v287 = vld [vmem:[%s231 + $0x348] sm:$0xff]
                %288 = vst [vmem:[%s232 + $0xd8] sm:$0xff] %v287
                %v289 = vld [vmem:[%s231 + $0x380] sm:$0xff]
                %290 = vst [vmem:[%s232 + $0xe0] sm:$0xff] %v289
                %v291 = vld [vmem:[%s231 + $0x388] sm:$0xff]
                %292 = vst [vmem:[%s232 + $0xe8] sm:$0xff] %v291
                %v293 = vld [vmem:[%s231 + $0x3c0] sm:$0xff]
                %294 = vst [vmem:[%s232 + $0xf0] sm:$0xff] %v293
                %v295 = vld [vmem:[%s231 + $0x3c8] sm:$0xff]
                %296 = vst [vmem:[%s232 + $0xf8] sm:$0xff] %v295
                %v297 = vld [vmem:[%s231 + $0x400] sm:$0xff]
                %298 = vst [vmem:[%s232 + $0x100] sm:$0xff] %v297
                %v299 = vld [vmem:[%s231 + $0x408] sm:$0xff]
                %300 = vst [vmem:[%s232 + $0x108] sm:$0xff] %v299
                %v301 = vld [vmem:[%s231 + $0x440] sm:$0xff]
                %302 = vst [vmem:[%s232 + $0x110] sm:$0xff] %v301
                %v303 = vld [vmem:[%s231 + $0x448] sm:$0xff]
                %304 = vst [vmem:[%s232 + $0x118] sm:$0xff] %v303
                %v305 = vld [vmem:[%s231 + $0x480] sm:$0xff]
                %306 = vst [vmem:[%s232 + $0x120] sm:$0xff] %v305
                %v307 = vld [vmem:[%s231 + $0x488] sm:$0xff]
                %308 = vst [vmem:[%s232 + $0x128] sm:$0xff] %v307
                %v309 = vld [vmem:[%s231 + $0x4c0] sm:$0xff]
                %310 = vst [vmem:[%s232 + $0x130] sm:$0xff] %v309
                %v311 = vld [vmem:[%s231 + $0x4c8] sm:$0xff]
                %312 = vst [vmem:[%s232 + $0x138] sm:$0xff] %v311
                %v313 = vld [vmem:[%s231 + $0x500] sm:$0xff]
                %314 = vst [vmem:[%s232 + $0x140] sm:$0xff] %v313
                %v315 = vld [vmem:[%s231 + $0x508] sm:$0xff]
                %316 = vst [vmem:[%s232 + $0x148] sm:$0xff] %v315
                %v317 = vld [vmem:[%s231 + $0x540] sm:$0xff]
                %318 = vst [vmem:[%s232 + $0x150] sm:$0xff] %v317
                %v319 = vld [vmem:[%s231 + $0x548] sm:$0xff]
                %320 = vst [vmem:[%s232 + $0x158] sm:$0xff] %v319
                %v321 = vld [vmem:[%s231 + $0x580] sm:$0xff]
                %322 = vst [vmem:[%s232 + $0x160] sm:$0xff] %v321
                %v323 = vld [vmem:[%s231 + $0x588] sm:$0xff]
                %324 = vst [vmem:[%s232 + $0x168] sm:$0xff] %v323
                %v325 = vld [vmem:[%s231 + $0x5c0] sm:$0xff]
                %326 = vst [vmem:[%s232 + $0x170] sm:$0xff] %v325
                %v327 = vld [vmem:[%s231 + $0x5c8] sm:$0xff]
                %328 = vst [vmem:[%s232 + $0x178] sm:$0xff] %v327
                %v329 = vld [vmem:[%s231 + $0x600] sm:$0xff]
                %330 = vst [vmem:[%s232 + $0x180] sm:$0xff] %v329
                %v331 = vld [vmem:[%s231 + $0x608] sm:$0xff]
                %332 = vst [vmem:[%s232 + $0x188] sm:$0xff] %v331
                %v333 = vld [vmem:[%s231 + $0x640] sm:$0xff]
                %334 = vst [vmem:[%s232 + $0x190] sm:$0xff] %v333
                %v335 = vld [vmem:[%s231 + $0x648] sm:$0xff]
                %336 = vst [vmem:[%s232 + $0x198] sm:$0xff] %v335
                %v337 = vld [vmem:[%s231 + $0x680] sm:$0xff]
                %338 = vst [vmem:[%s232 + $0x1a0] sm:$0xff] %v337
                %v339 = vld [vmem:[%s231 + $0x688] sm:$0xff]
                %340 = vst [vmem:[%s232 + $0x1a8] sm:$0xff] %v339
                %v341 = vld [vmem:[%s231 + $0x6c0] sm:$0xff]
                %342 = vst [vmem:[%s232 + $0x1b0] sm:$0xff] %v341
                %v343 = vld [vmem:[%s231 + $0x6c8] sm:$0xff]
                %344 = vst [vmem:[%s232 + $0x1b8] sm:$0xff] %v343
                %v345 = vld [vmem:[%s231 + $0x700] sm:$0xff]
                %346 = vst [vmem:[%s232 + $0x1c0] sm:$0xff] %v345
                %v347 = vld [vmem:[%s231 + $0x708] sm:$0xff]
                %348 = vst [vmem:[%s232 + $0x1c8] sm:$0xff] %v347
                %v349 = vld [vmem:[%s231 + $0x740] sm:$0xff]
                %350 = vst [vmem:[%s232 + $0x1d0] sm:$0xff] %v349
                %v351 = vld [vmem:[%s231 + $0x748] sm:$0xff]
                %352 = vst [vmem:[%s232 + $0x1d8] sm:$0xff] %v351
                %v353 = vld [vmem:[%s231 + $0x780] sm:$0xff]
                %354 = vst [vmem:[%s232 + $0x1e0] sm:$0xff] %v353
                %v355 = vld [vmem:[%s231 + $0x788] sm:$0xff]
                %356 = vst [vmem:[%s232 + $0x1e8] sm:$0xff] %v355
                %v357 = vld [vmem:[%s231 + $0x7c0] sm:$0xff]
                %358 = vst [vmem:[%s232 + $0x1f0] sm:$0xff] %v357
                %v359 = vld [vmem:[%s231 + $0x7c8] sm:$0xff]
                %360 = vst [vmem:[%s232 + $0x1f8] sm:$0xff] %v359
                %v361 = vld [vmem:[%s231 + $0x800] sm:$0xff]
                %362 = vst [vmem:[%s232 + $0x200] sm:$0xff] %v361
                %v363 = vld [vmem:[%s231 + $0x808] sm:$0xff]
                %364 = vst [vmem:[%s232 + $0x208] sm:$0xff] %v363
                %v365 = vld [vmem:[%s231 + $0x840] sm:$0xff]
                %366 = vst [vmem:[%s232 + $0x210] sm:$0xff] %v365
                %v367 = vld [vmem:[%s231 + $0x848] sm:$0xff]
                %368 = vst [vmem:[%s232 + $0x218] sm:$0xff] %v367
                %v369 = vld [vmem:[%s231 + $0x880] sm:$0xff]
                %370 = vst [vmem:[%s232 + $0x220] sm:$0xff] %v369
                %v371 = vld [vmem:[%s231 + $0x888] sm:$0xff]
                %372 = vst [vmem:[%s232 + $0x228] sm:$0xff] %v371
                %v373 = vld [vmem:[%s231 + $0x8c0] sm:$0xff]
                %374 = vst [vmem:[%s232 + $0x230] sm:$0xff] %v373
                %v375 = vld [vmem:[%s231 + $0x8c8] sm:$0xff]
                %376 = vst [vmem:[%s232 + $0x238] sm:$0xff] %v375
                %v377 = vld [vmem:[%s231 + $0x900] sm:$0xff]
                %378 = vst [vmem:[%s232 + $0x240] sm:$0xff] %v377
                %v379 = vld [vmem:[%s231 + $0x908] sm:$0xff]
                %380 = vst [vmem:[%s232 + $0x248] sm:$0xff] %v379
                %v381 = vld [vmem:[%s231 + $0x940] sm:$0xff]
                %382 = vst [vmem:[%s232 + $0x250] sm:$0xff] %v381
                %v383 = vld [vmem:[%s231 + $0x948] sm:$0xff]
                %384 = vst [vmem:[%s232 + $0x258] sm:$0xff] %v383
                %v385 = vld [vmem:[%s231 + $0x980] sm:$0xff]
                %386 = vst [vmem:[%s232 + $0x260] sm:$0xff] %v385
                %v387 = vld [vmem:[%s231 + $0x988] sm:$0xff]
                %388 = vst [vmem:[%s232 + $0x268] sm:$0xff] %v387
                %v389 = vld [vmem:[%s231 + $0x9c0] sm:$0xff]
                %390 = vst [vmem:[%s232 + $0x270] sm:$0xff] %v389
                %v391 = vld [vmem:[%s231 + $0x9c8] sm:$0xff]
                %392 = vst [vmem:[%s232 + $0x278] sm:$0xff] %v391
                %v393 = vld [vmem:[%s231 + $0xa00] sm:$0xff]
                %394 = vst [vmem:[%s232 + $0x280] sm:$0xff] %v393
                %v395 = vld [vmem:[%s231 + $0xa08] sm:$0xff]
                %396 = vst [vmem:[%s232 + $0x288] sm:$0xff] %v395
                %v397 = vld [vmem:[%s231 + $0xa40] sm:$0xff]
                %398 = vst [vmem:[%s232 + $0x290] sm:$0xff] %v397
                %v399 = vld [vmem:[%s231 + $0xa48] sm:$0xff]
                %400 = vst [vmem:[%s232 + $0x298] sm:$0xff] %v399
                %v401 = vld [vmem:[%s231 + $0xa80] sm:$0xff]
                %402 = vst [vmem:[%s232 + $0x2a0] sm:$0xff] %v401
                %v403 = vld [vmem:[%s231 + $0xa88] sm:$0xff]
                %404 = vst [vmem:[%s232 + $0x2a8] sm:$0xff] %v403
                %v405 = vld [vmem:[%s231 + $0xac0] sm:$0xff]
                %406 = vst [vmem:[%s232 + $0x2b0] sm:$0xff] %v405
                %v407 = vld [vmem:[%s231 + $0xac8] sm:$0xff]
                %408 = vst [vmem:[%s232 + $0x2b8] sm:$0xff] %v407
                %v409 = vld [vmem:[%s231 + $0xb00] sm:$0xff]
                %410 = vst [vmem:[%s232 + $0x2c0] sm:$0xff] %v409
                %v411 = vld [vmem:[%s231 + $0xb08] sm:$0xff]
                %412 = vst [vmem:[%s232 + $0x2c8] sm:$0xff] %v411
                %v413 = vld [vmem:[%s231 + $0xb40] sm:$0xff]
                %414 = vst [vmem:[%s232 + $0x2d0] sm:$0xff] %v413
                %v415 = vld [vmem:[%s231 + $0xb48] sm:$0xff]
                %416 = vst [vmem:[%s232 + $0x2d8] sm:$0xff] %v415
                %v417 = vld [vmem:[%s231 + $0xb80] sm:$0xff]
                %418 = vst [vmem:[%s232 + $0x2e0] sm:$0xff] %v417
                %v419 = vld [vmem:[%s231 + $0xb88] sm:$0xff]
                %420 = vst [vmem:[%s232 + $0x2e8] sm:$0xff] %v419
                %v421 = vld [vmem:[%s231 + $0xbc0] sm:$0xff]
                %422 = vst [vmem:[%s232 + $0x2f0] sm:$0xff] %v421
                %v423 = vld [vmem:[%s231 + $0xbc8] sm:$0xff]
                %424 = vst [vmem:[%s232 + $0x2f8] sm:$0xff] %v423
              $region37: #{model_forward.1} parent=31 // loop_footer
                %s230 = sadd.s32 1, %s226
              $region38: #{model_forward.1} parent=31 // loop_footer_branch
                %225 = sbr.rel target = $region34
              $region39: #{model_forward.1} parent=31 // loop_exit
                _
            $region32: #{model_forward.1} parent=27 // pred_fallthru
              _
            // Predicated region
            $region40: #{model_forward.1} parent=27 // pred_check
              _
            $region41: #{model_forward.1} parent=27 // pred_check_branch
              %426 = sbr.rel target = $region43
            $region42: #{model_forward.1} parent=27 // pred_region
              _
            $region43: #{model_forward.1} parent=27 // pred_fallthru
              _
          $region28: #{model_forward.1} parent=23 // pred_fallthru
            _
          %427 = vnop
        $region24: #{model_forward.1} parent=15 // pred_fallthru
          _
        // Predicated region
        $region44: #{model_forward.1} parent=15 // pred_check
          %p428 = pneg %p96
        $region45: #{model_forward.1} parent=15 // pred_check_branch
          %430 = sbr.rel (%p428) target = $region47
        $region46: #{model_forward.1} parent=15 // pred_region
          %s431 = smul.u32 4, %s20
          %p432 = scmp.lt.s32.totalorder %s431, 15
          %s433 = scalar_select %p432, %s431, 15
          %s434 = scalar_lea.vmem %s2, %s433
          %s435 = smul.u32 4, %s20
        $region47: #{model_forward.1} parent=15 // pred_fallthru
          _
        // Predicated region
        $region48: #{model_forward.1} parent=15 // pred_check
          %p436 = pneg %p122
        $region49: #{model_forward.1} parent=15 // pred_check_branch
          %438 = sbr.rel (%p436) target = $region51
        $region50: #{model_forward.1} parent=15 // pred_region
          %s439 = smul.u32 64, %s20
          %p440 = scmp.lt.s32.totalorder %s439, 255
          %s441 = scalar_select %p440, %s439, 255
          %s442 = smul.addr %s441, 4
          %s443 = scalar_lea.vmem %s3, %s442
          %s444 = smul.u32 64, %s20
        $region51: #{model_forward.1} parent=15 // pred_fallthru
          _
      $region16: #{model_forward.1} parent=5 // pred_fallthru
        _
      %p445 = scmp.le.s32.totalorder 1, %s12
      %p446 = scmp.lt.s32.totalorder %s12, 9
      %p447 = pnand %p445, %p446
      %p448 = pneg %p447
      // Predicated region
      $region52: #{model_forward.1} parent=5 // pred_check
        _
      $region53: #{model_forward.1} parent=5 // pred_check_branch
        %450 = sbr.rel (%p447) target = $region55
      $region54: #{model_forward.1} parent=5 // pred_region
        %s451 = ssub.s32 %s12, 1
        %s452 = sand.u32 %s63, 1
        %s453 = sand.u32 %s63, 1
        %s454 = smul.addr %s453, 768
        %s455 = scalar_lea.vmem [#allocation2], %s454
        // Predicated region
        $region56: #{model_forward.1} parent=54 // pred_check
          %p456 = pneg %p76
        $region57: #{model_forward.1} parent=54 // pred_check_branch
          %458 = sbr.rel (%p456) target = $region59
        $region58: #{model_forward.1} parent=54 // pred_region
          _
        $region59: #{model_forward.1} parent=54 // pred_fallthru
          _
        %s459 = smul.u32 2, %s21
        %p460 = scmp.lt.s32.totalorder %s459, 3
        %s461 = scalar_select %p460, %s459, 3
        %s462 = smul.addr %s461, 3
        %s463 = smul.addr %s462, 4
        %s464 = scalar_lea.vmem %s0, %s463
        %p465 = pneg %p50
        %p466 = pneg %p47
        %s467 = sand.u32 %s63, 1
        %s468 = sand.u32 %s63, 1
        %s469 = smul.addr %s468, 768
        %s470 = scalar_lea.vmem [#allocation2], %s469
        %p471 = pneg %p76
        %p472 = pneg %p73
        %s473 = smul.u32 4, %s22
        %p474 = scmp.lt.s32.totalorder %s473, 15
        %s475 = scalar_select %p474, %s473, 15
        %s476 = scalar_lea.vmem %s2, %s475
        %p477 = pneg %p102
        %p478 = pneg %p99
        %s479 = smul.u32 64, %s22
        %p480 = scmp.lt.s32.totalorder %s479, 255
        %s481 = scalar_select %p480, %s479, 255
        %s482 = smul.addr %s481, 4
        %s483 = scalar_lea.vmem %s3, %s482
        %p484 = pneg %p128
        %p485 = pneg %p125
        %p486 = pneg %p156
        %p487 = pneg %p153
        %s488 = sand.u32 %s143, 1
        %s489 = sand.u32 %s143, 1
        %s490 = smul.addr %s489, 32
        %s491 = scalar_lea.vmem [#allocation3], %s490
        %p492 = pneg %p182
        %p493 = pneg %p179
        %s494 = smul.u32 2, %s21
        %p495 = scmp.lt.s32.totalorder %s494, 3
        %s496 = scalar_select %p495, %s494, 3
        %s497 = smul.addr %s496, 8
        %s498 = scalar_lea.vmem %s5, %s497
        %s499 = smul.u32 2, %s21
        %p500 = scmp.lt.s32.totalorder %s499, 3
        %s501 = scalar_select %p500, %s499, 3
        %s502 = smul.addr %s501, 3
        %s503 = smul.addr %s502, 4
        %s504 = scalar_lea.vmem %s0, %s503
        %s505 = smul.u32 2, %s21
        %s506 = smul.u32 4, %s22
        %s507 = smul.u32 4, %s22
        %p508 = scmp.lt.s32.totalorder %s507, 15
        %s509 = scalar_select %p508, %s507, 15
        %s510 = scalar_lea.vmem %s2, %s509
        %s511 = smul.u32 4, %s22
        %s512 = smul.u32 64, %s22
        %p513 = scmp.lt.s32.totalorder %s512, 255
        %s514 = scalar_select %p513, %s512, 255
        %s515 = smul.addr %s514, 4
        %s516 = scalar_lea.vmem %s3, %s515
        %s517 = smul.u32 64, %s22
        %s518 = smul.u32 2, %s21
        %s519 = smul.u32 4, %s22
        %s520 = smul.u32 2, %s21
        %p521 = scmp.lt.s32.totalorder %s520, 3
        %s522 = scalar_select %p521, %s520, 3
        %s523 = smul.addr %s522, 8
        %s524 = scalar_lea.vmem %s5, %s523
        %s525 = smul.u32 2, %s21
        %p526 = scmp.eq.s32.totalorder %s22, 0
        // Predicated region
        $region60: #{model_forward.1} parent=54 // pred_check
          %p527 = pneg %p526
        $region61: #{model_forward.1} parent=54 // pred_check_branch
          %529 = sbr.rel (%p527) target = $region63
        $region62: #{model_forward.1} parent=54 // pred_region
          %530 = vst [vmem:[%s524] sm:$0xff] 0.0
          %531 = vst [vmem:[%s524 + $0x8] sm:$0xff] 0.0
        $region63: #{model_forward.1} parent=54 // pred_fallthru
          _
        %v532 = vld [vmem:[%s504] sm:$0xff]
        %v533 = vld [vmem:[%s504 + $0x8] sm:$0xf]
        %v534 = vld [vmem:[%s504 + $0xc] sm:$0xff]
        %v535 = vld [vmem:[%s504 + $0x14] sm:$0xf]
        %v536 = vld [vmem:[%s455] sm:$0xff]
        %v537 = vld [vmem:[%s455 + $0x8] sm:$0xff]
        %v538 = vld [vmem:[%s455 + $0x10] sm:$0xff]
        %v539 = vld [vmem:[%s455 + $0x18] sm:$0xff]
        %v540 = vld [vmem:[%s455 + $0x20] sm:$0xff]
        %v541 = vld [vmem:[%s455 + $0x28] sm:$0xff]
        %v542 = vld [vmem:[%s455 + $0x30] sm:$0xff]
        %v543 = vld [vmem:[%s455 + $0x38] sm:$0xff]
        %v544 = vld [vmem:[%s455 + $0x40] sm:$0xff]
        %v545 = vld [vmem:[%s455 + $0x48] sm:$0xff]
        %v546 = vld [vmem:[%s455 + $0x50] sm:$0xff]
        %v547 = vld [vmem:[%s455 + $0x58] sm:$0xff]
        %v548 = vld [vmem:[%s455 + $0x60] sm:$0xff]
        %v549 = vld [vmem:[%s455 + $0x68] sm:$0xff]
        %v550 = vld [vmem:[%s455 + $0x70] sm:$0xff]
        %v551 = vld [vmem:[%s455 + $0x78] sm:$0xff]
        %v552 = vld [vmem:[%s455 + $0x80] sm:$0xff]
        %v553 = vld [vmem:[%s455 + $0x88] sm:$0xff]
        %v554 = vld [vmem:[%s455 + $0x90] sm:$0xff]
        %v555 = vld [vmem:[%s455 + $0x98] sm:$0xff]
        %v556 = vld [vmem:[%s455 + $0xa0] sm:$0xff]
        %v557 = vld [vmem:[%s455 + $0xa8] sm:$0xff]
        %v558 = vld [vmem:[%s455 + $0xb0] sm:$0xff]
        %v559 = vld [vmem:[%s455 + $0xb8] sm:$0xff]
        %v560 = vld [vmem:[%s455 + $0xc0] sm:$0xff]
        %v561 = vld [vmem:[%s455 + $0xc8] sm:$0xff]
        %v562 = vld [vmem:[%s455 + $0xd0] sm:$0xff]
        %v563 = vld [vmem:[%s455 + $0xd8] sm:$0xff]
        %v564 = vld [vmem:[%s455 + $0xe0] sm:$0xff]
        %v565 = vld [vmem:[%s455 + $0xe8] sm:$0xff]
        %v566 = vld [vmem:[%s455 + $0xf0] sm:$0xff]
        %v567 = vld [vmem:[%s455 + $0xf8] sm:$0xff]
        %v568 = vld [vmem:[%s455 + $0x100] sm:$0xff]
        %v569 = vld [vmem:[%s455 + $0x108] sm:$0xff]
        %v570 = vld [vmem:[%s455 + $0x110] sm:$0xff]
        %v571 = vld [vmem:[%s455 + $0x118] sm:$0xff]
        %v572 = vld [vmem:[%s455 + $0x120] sm:$0xff]
        %v573 = vld [vmem:[%s455 + $0x128] sm:$0xff]
        %v574 = vld [vmem:[%s455 + $0x130] sm:$0xff]
        %v575 = vld [vmem:[%s455 + $0x138] sm:$0xff]
        %v576 = vld [vmem:[%s455 + $0x140] sm:$0xff]
        %v577 = vld [vmem:[%s455 + $0x148] sm:$0xff]
        %v578 = vld [vmem:[%s455 + $0x150] sm:$0xff]
        %v579 = vld [vmem:[%s455 + $0x158] sm:$0xff]
        %v580 = vld [vmem:[%s455 + $0x160] sm:$0xff]
        %v581 = vld [vmem:[%s455 + $0x168] sm:$0xff]
        %v582 = vld [vmem:[%s455 + $0x170] sm:$0xff]
        %v583 = vld [vmem:[%s455 + $0x178] sm:$0xff]
        %v584 = vld [vmem:[%s455 + $0x180] sm:$0xff]
        %v585 = vld [vmem:[%s455 + $0x188] sm:$0xff]
        %v586 = vld [vmem:[%s455 + $0x190] sm:$0xff]
        %v587 = vld [vmem:[%s455 + $0x198] sm:$0xff]
        %v588 = vld [vmem:[%s455 + $0x1a0] sm:$0xff]
        %v589 = vld [vmem:[%s455 + $0x1a8] sm:$0xff]
        %v590 = vld [vmem:[%s455 + $0x1b0] sm:$0xff]
        %v591 = vld [vmem:[%s455 + $0x1b8] sm:$0xff]
        %v592 = vld [vmem:[%s455 + $0x1c0] sm:$0xff]
        %v593 = vld [vmem:[%s455 + $0x1c8] sm:$0xff]
        %v594 = vld [vmem:[%s455 + $0x1d0] sm:$0xff]
        %v595 = vld [vmem:[%s455 + $0x1d8] sm:$0xff]
        %v596 = vld [vmem:[%s455 + $0x1e0] sm:$0xff]
        %v597 = vld [vmem:[%s455 + $0x1e8] sm:$0xff]
        %v598 = vld [vmem:[%s455 + $0x1f0] sm:$0xff]
        %v599 = vld [vmem:[%s455 + $0x1f8] sm:$0xff]
        %v600 = vld [vmem:[%s455 + $0x200] sm:$0xff]
        %v601 = vld [vmem:[%s455 + $0x208] sm:$0xff]
        %v602 = vld [vmem:[%s455 + $0x210] sm:$0xff]
        %v603 = vld [vmem:[%s455 + $0x218] sm:$0xff]
        %v604 = vld [vmem:[%s455 + $0x220] sm:$0xff]
        %v605 = vld [vmem:[%s455 + $0x228] sm:$0xff]
        %v606 = vld [vmem:[%s455 + $0x230] sm:$0xff]
        %v607 = vld [vmem:[%s455 + $0x238] sm:$0xff]
        %v608 = vld [vmem:[%s455 + $0x240] sm:$0xff]
        %v609 = vld [vmem:[%s455 + $0x248] sm:$0xff]
        %v610 = vld [vmem:[%s455 + $0x250] sm:$0xff]
        %v611 = vld [vmem:[%s455 + $0x258] sm:$0xff]
        %v612 = vld [vmem:[%s455 + $0x260] sm:$0xff]
        %v613 = vld [vmem:[%s455 + $0x268] sm:$0xff]
        %v614 = vld [vmem:[%s455 + $0x270] sm:$0xff]
        %v615 = vld [vmem:[%s455 + $0x278] sm:$0xff]
        %v616 = vld [vmem:[%s455 + $0x280] sm:$0xff]
        %v617 = vld [vmem:[%s455 + $0x288] sm:$0xff]
        %v618 = vld [vmem:[%s455 + $0x290] sm:$0xff]
        %v619 = vld [vmem:[%s455 + $0x298] sm:$0xff]
        %v620 = vld [vmem:[%s455 + $0x2a0] sm:$0xff]
        %v621 = vld [vmem:[%s455 + $0x2a8] sm:$0xff]
        %v622 = vld [vmem:[%s455 + $0x2b0] sm:$0xff]
        %v623 = vld [vmem:[%s455 + $0x2b8] sm:$0xff]
        %v624 = vld [vmem:[%s455 + $0x2c0] sm:$0xff]
        %v625 = vld [vmem:[%s455 + $0x2c8] sm:$0xff]
        %v626 = vld [vmem:[%s455 + $0x2d0] sm:$0xff]
        %v627 = vld [vmem:[%s455 + $0x2d8] sm:$0xff]
        %v628 = vld [vmem:[%s455 + $0x2e0] sm:$0xff]
        %v629 = vld [vmem:[%s455 + $0x2e8] sm:$0xff]
        %v630 = vld [vmem:[%s455 + $0x2f0] sm:$0xff]
        %v631 = vld [vmem:[%s455 + $0x2f8] sm:$0xff]
        %v632 = vld [vmem:[%s510] sm:$0xf]
        %v634 = vperm.slane %v632, 0
        %v635 = vperm.slane %v632, 1
        %v636 = vperm.slane %v632, 2
        %v637 = vperm.slane %v632, 3
        %v646 = vunpack.c.l.b16 %v532
        %v647 = vunpack.c.h.b16 %v532
        %v648 = vunpack.c.l.b16 %v533
        %v649 = vunpack.c.l.b16 %v534
        %v650 = vunpack.c.h.b16 %v534
        %v651 = vunpack.c.l.b16 %v535
        %v652 = vpack.c.b16 %v649, %v646
        %v653 = vpack.c.b16 %v650, %v647
        %v654 = vpack.c.b16 %v651, %v648
        %v754 = vunpack.c.l.b16 %v536
        %v755 = vunpack.c.h.b16 %v536
        %v756 = vunpack.c.l.b16 %v537
        %v757 = vunpack.c.h.b16 %v537
        %v758 = vunpack.c.l.b16 %v538
        %v759 = vunpack.c.h.b16 %v538
        %v760 = vunpack.c.l.b16 %v539
        %v761 = vunpack.c.h.b16 %v539
        %v762 = vunpack.c.l.b16 %v540
        %v763 = vunpack.c.h.b16 %v540
        %v764 = vunpack.c.l.b16 %v541
        %v765 = vunpack.c.h.b16 %v541
        %v766 = vunpack.c.l.b16 %v542
        %v767 = vunpack.c.h.b16 %v542
        %v768 = vunpack.c.l.b16 %v543
        %v769 = vunpack.c.h.b16 %v543
        %v770 = vunpack.c.l.b16 %v544
        %v771 = vunpack.c.h.b16 %v544
        %v772 = vunpack.c.l.b16 %v545
        %v773 = vunpack.c.h.b16 %v545
        %v774 = vunpack.c.l.b16 %v546
        %v775 = vunpack.c.h.b16 %v546
        %v776 = vunpack.c.l.b16 %v547
        %v777 = vunpack.c.h.b16 %v547
        %v778 = vunpack.c.l.b16 %v548
        %v779 = vunpack.c.h.b16 %v548
        %v780 = vunpack.c.l.b16 %v549
        %v781 = vunpack.c.h.b16 %v549
        %v782 = vunpack.c.l.b16 %v550
        %v783 = vunpack.c.h.b16 %v550
        %v784 = vunpack.c.l.b16 %v551
        %v785 = vunpack.c.h.b16 %v551
        %v786 = vunpack.c.l.b16 %v552
        %v787 = vunpack.c.h.b16 %v552
        %v788 = vunpack.c.l.b16 %v553
        %v789 = vunpack.c.h.b16 %v553
        %v790 = vunpack.c.l.b16 %v554
        %v791 = vunpack.c.h.b16 %v554
        %v792 = vunpack.c.l.b16 %v555
        %v793 = vunpack.c.h.b16 %v555
        %v794 = vunpack.c.l.b16 %v556
        %v795 = vunpack.c.h.b16 %v556
        %v796 = vunpack.c.l.b16 %v557
        %v797 = vunpack.c.h.b16 %v557
        %v798 = vunpack.c.l.b16 %v558
        %v799 = vunpack.c.h.b16 %v558
        %v800 = vunpack.c.l.b16 %v559
        %v801 = vunpack.c.h.b16 %v559
        %v802 = vunpack.c.l.b16 %v560
        %v803 = vunpack.c.h.b16 %v560
        %v804 = vunpack.c.l.b16 %v561
        %v805 = vunpack.c.h.b16 %v561
        %v806 = vunpack.c.l.b16 %v562
        %v807 = vunpack.c.h.b16 %v562
        %v808 = vunpack.c.l.b16 %v563
        %v809 = vunpack.c.h.b16 %v563
        %v810 = vunpack.c.l.b16 %v564
        %v811 = vunpack.c.h.b16 %v564
        %v812 = vunpack.c.l.b16 %v565
        %v813 = vunpack.c.h.b16 %v565
        %v814 = vunpack.c.l.b16 %v566
        %v815 = vunpack.c.h.b16 %v566
        %v816 = vunpack.c.l.b16 %v567
        %v817 = vunpack.c.h.b16 %v567
        %v818 = vunpack.c.l.b16 %v568
        %v819 = vunpack.c.h.b16 %v568
        %v820 = vunpack.c.l.b16 %v569
        %v821 = vunpack.c.h.b16 %v569
        %v822 = vunpack.c.l.b16 %v570
        %v823 = vunpack.c.h.b16 %v570
        %v824 = vunpack.c.l.b16 %v571
        %v825 = vunpack.c.h.b16 %v571
        %v826 = vunpack.c.l.b16 %v572
        %v827 = vunpack.c.h.b16 %v572
        %v828 = vunpack.c.l.b16 %v573
        %v829 = vunpack.c.h.b16 %v573
        %v830 = vunpack.c.l.b16 %v574
        %v831 = vunpack.c.h.b16 %v574
        %v832 = vunpack.c.l.b16 %v575
        %v833 = vunpack.c.h.b16 %v575
        %v834 = vunpack.c.l.b16 %v576
        %v835 = vunpack.c.h.b16 %v576
        %v836 = vunpack.c.l.b16 %v577
        %v837 = vunpack.c.h.b16 %v577
        %v838 = vunpack.c.l.b16 %v578
        %v839 = vunpack.c.h.b16 %v578
        %v840 = vunpack.c.l.b16 %v579
        %v841 = vunpack.c.h.b16 %v579
        %v842 = vunpack.c.l.b16 %v580
        %v843 = vunpack.c.h.b16 %v580
        %v844 = vunpack.c.l.b16 %v581
        %v845 = vunpack.c.h.b16 %v581
        %v846 = vunpack.c.l.b16 %v582
        %v847 = vunpack.c.h.b16 %v582
        %v848 = vunpack.c.l.b16 %v583
        %v849 = vunpack.c.h.b16 %v583
        %v850 = vunpack.c.l.b16 %v584
        %v851 = vunpack.c.h.b16 %v584
        %v852 = vunpack.c.l.b16 %v585
        %v853 = vunpack.c.h.b16 %v585
        %v854 = vunpack.c.l.b16 %v586
        %v855 = vunpack.c.h.b16 %v586
        %v856 = vunpack.c.l.b16 %v587
        %v857 = vunpack.c.h.b16 %v587
        %v858 = vunpack.c.l.b16 %v588
        %v859 = vunpack.c.h.b16 %v588
        %v860 = vunpack.c.l.b16 %v589
        %v861 = vunpack.c.h.b16 %v589
        %v862 = vunpack.c.l.b16 %v590
        %v863 = vunpack.c.h.b16 %v590
        %v864 = vunpack.c.l.b16 %v591
        %v865 = vunpack.c.h.b16 %v591
        %v866 = vunpack.c.l.b16 %v592
        %v867 = vunpack.c.h.b16 %v592
        %v868 = vunpack.c.l.b16 %v593
        %v869 = vunpack.c.h.b16 %v593
        %v870 = vunpack.c.l.b16 %v594
        %v871 = vunpack.c.h.b16 %v594
        %v872 = vunpack.c.l.b16 %v595
        %v873 = vunpack.c.h.b16 %v595
        %v874 = vunpack.c.l.b16 %v596
        %v875 = vunpack.c.h.b16 %v596
        %v876 = vunpack.c.l.b16 %v597
        %v877 = vunpack.c.h.b16 %v597
        %v878 = vunpack.c.l.b16 %v598
        %v879 = vunpack.c.h.b16 %v598
        %v880 = vunpack.c.l.b16 %v599
        %v881 = vunpack.c.h.b16 %v599
        %v882 = vunpack.c.l.b16 %v600
        %v883 = vunpack.c.h.b16 %v600
        %v884 = vunpack.c.l.b16 %v601
        %v885 = vunpack.c.h.b16 %v601
        %v886 = vunpack.c.l.b16 %v602
        %v887 = vunpack.c.h.b16 %v602
        %v888 = vunpack.c.l.b16 %v603
        %v889 = vunpack.c.h.b16 %v603
        %v890 = vunpack.c.l.b16 %v604
        %v891 = vunpack.c.h.b16 %v604
        %v892 = vunpack.c.l.b16 %v605
        %v893 = vunpack.c.h.b16 %v605
        %v894 = vunpack.c.l.b16 %v606
        %v895 = vunpack.c.h.b16 %v606
        %v896 = vunpack.c.l.b16 %v607
        %v897 = vunpack.c.h.b16 %v607
        %v898 = vunpack.c.l.b16 %v608
        %v899 = vunpack.c.h.b16 %v608
        %v900 = vunpack.c.l.b16 %v609
        %v901 = vunpack.c.h.b16 %v609
        %v902 = vunpack.c.l.b16 %v610
        %v903 = vunpack.c.h.b16 %v610
        %v904 = vunpack.c.l.b16 %v611
        %v905 = vunpack.c.h.b16 %v611
        %v906 = vunpack.c.l.b16 %v612
        %v907 = vunpack.c.h.b16 %v612
        %v908 = vunpack.c.l.b16 %v613
        %v909 = vunpack.c.h.b16 %v613
        %v910 = vunpack.c.l.b16 %v614
        %v911 = vunpack.c.h.b16 %v614
        %v912 = vunpack.c.l.b16 %v615
        %v913 = vunpack.c.h.b16 %v615
        %v914 = vunpack.c.l.b16 %v616
        %v915 = vunpack.c.h.b16 %v616
        %v916 = vunpack.c.l.b16 %v617
        %v917 = vunpack.c.h.b16 %v617
        %v918 = vunpack.c.l.b16 %v618
        %v919 = vunpack.c.h.b16 %v618
        %v920 = vunpack.c.l.b16 %v619
        %v921 = vunpack.c.h.b16 %v619
        %v922 = vunpack.c.l.b16 %v620
        %v923 = vunpack.c.h.b16 %v620
        %v924 = vunpack.c.l.b16 %v621
        %v925 = vunpack.c.h.b16 %v621
        %v926 = vunpack.c.l.b16 %v622
        %v927 = vunpack.c.h.b16 %v622
        %v928 = vunpack.c.l.b16 %v623
        %v929 = vunpack.c.h.b16 %v623
        %v930 = vunpack.c.l.b16 %v624
        %v931 = vunpack.c.h.b16 %v624
        %v932 = vunpack.c.l.b16 %v625
        %v933 = vunpack.c.h.b16 %v625
        %v934 = vunpack.c.l.b16 %v626
        %v935 = vunpack.c.h.b16 %v626
        %v936 = vunpack.c.l.b16 %v627
        %v937 = vunpack.c.h.b16 %v627
        %v938 = vunpack.c.l.b16 %v628
        %v939 = vunpack.c.h.b16 %v628
        %v940 = vunpack.c.l.b16 %v629
        %v941 = vunpack.c.h.b16 %v629
        %v942 = vunpack.c.l.b16 %v630
        %v943 = vunpack.c.h.b16 %v630
        %v944 = vunpack.c.l.b16 %v631
        %v945 = vunpack.c.h.b16 %v631
        %v946 = vpack.c.b16 %v758, %v754
        %v947 = vpack.c.b16 %v759, %v755
        %v948 = vpack.c.b16 %v760, %v756
        %v949 = vpack.c.b16 %v761, %v757
        %v950 = vpack.c.b16 %v766, %v762
        %v951 = vpack.c.b16 %v767, %v763
        %v952 = vpack.c.b16 %v768, %v764
        %v953 = vpack.c.b16 %v769, %v765
        %v954 = vpack.c.b16 %v774, %v770
        %v955 = vpack.c.b16 %v775, %v771
        %v956 = vpack.c.b16 %v776, %v772
        %v957 = vpack.c.b16 %v777, %v773
        %v958 = vpack.c.b16 %v782, %v778
        %v959 = vpack.c.b16 %v783, %v779
        %v960 = vpack.c.b16 %v784, %v780
        %v961 = vpack.c.b16 %v785, %v781
        %v962 = vpack.c.b16 %v790, %v786
        %v963 = vpack.c.b16 %v791, %v787
        %v964 = vpack.c.b16 %v792, %v788
        %v965 = vpack.c.b16 %v793, %v789
        %v966 = vpack.c.b16 %v798, %v794
        %v967 = vpack.c.b16 %v799, %v795
        %v968 = vpack.c.b16 %v800, %v796
        %v969 = vpack.c.b16 %v801, %v797
        %v970 = vpack.c.b16 %v806, %v802
        %v971 = vpack.c.b16 %v807, %v803
        %v972 = vpack.c.b16 %v808, %v804
        %v973 = vpack.c.b16 %v809, %v805
        %v974 = vpack.c.b16 %v814, %v810
        %v975 = vpack.c.b16 %v815, %v811
        %v976 = vpack.c.b16 %v816, %v812
        %v977 = vpack.c.b16 %v817, %v813
        %v978 = vpack.c.b16 %v822, %v818
        %v979 = vpack.c.b16 %v823, %v819
        %v980 = vpack.c.b16 %v824, %v820
        %v981 = vpack.c.b16 %v825, %v821
        %v982 = vpack.c.b16 %v830, %v826
        %v983 = vpack.c.b16 %v831, %v827
        %v984 = vpack.c.b16 %v832, %v828
        %v985 = vpack.c.b16 %v833, %v829
        %v986 = vpack.c.b16 %v838, %v834
        %v987 = vpack.c.b16 %v839, %v835
        %v988 = vpack.c.b16 %v840, %v836
        %v989 = vpack.c.b16 %v841, %v837
        %v990 = vpack.c.b16 %v846, %v842
        %v991 = vpack.c.b16 %v847, %v843
        %v992 = vpack.c.b16 %v848, %v844
        %v993 = vpack.c.b16 %v849, %v845
        %v994 = vpack.c.b16 %v854, %v850
        %v995 = vpack.c.b16 %v855, %v851
        %v996 = vpack.c.b16 %v856, %v852
        %v997 = vpack.c.b16 %v857, %v853
        %v998 = vpack.c.b16 %v862, %v858
        %v999 = vpack.c.b16 %v863, %v859
        %v1000 = vpack.c.b16 %v864, %v860
        %v1001 = vpack.c.b16 %v865, %v861
        %v1002 = vpack.c.b16 %v870, %v866
        %v1003 = vpack.c.b16 %v871, %v867
        %v1004 = vpack.c.b16 %v872, %v868
        %v1005 = vpack.c.b16 %v873, %v869
        %v1006 = vpack.c.b16 %v878, %v874
        %v1007 = vpack.c.b16 %v879, %v875
        %v1008 = vpack.c.b16 %v880, %v876
        %v1009 = vpack.c.b16 %v881, %v877
        %v1010 = vpack.c.b16 %v886, %v882
        %v1011 = vpack.c.b16 %v887, %v883
        %v1012 = vpack.c.b16 %v888, %v884
        %v1013 = vpack.c.b16 %v889, %v885
        %v1014 = vpack.c.b16 %v894, %v890
        %v1015 = vpack.c.b16 %v895, %v891
        %v1016 = vpack.c.b16 %v896, %v892
        %v1017 = vpack.c.b16 %v897, %v893
        %v1018 = vpack.c.b16 %v902, %v898
        %v1019 = vpack.c.b16 %v903, %v899
        %v1020 = vpack.c.b16 %v904, %v900
        %v1021 = vpack.c.b16 %v905, %v901
        %v1022 = vpack.c.b16 %v910, %v906
        %v1023 = vpack.c.b16 %v911, %v907
        %v1024 = vpack.c.b16 %v912, %v908
        %v1025 = vpack.c.b16 %v913, %v909
        %v1026 = vpack.c.b16 %v918, %v914
        %v1027 = vpack.c.b16 %v919, %v915
        %v1028 = vpack.c.b16 %v920, %v916
        %v1029 = vpack.c.b16 %v921, %v917
        %v1030 = vpack.c.b16 %v926, %v922
        %v1031 = vpack.c.b16 %v927, %v923
        %v1032 = vpack.c.b16 %v928, %v924
        %v1033 = vpack.c.b16 %v929, %v925
        %v1034 = vpack.c.b16 %v934, %v930
        %v1035 = vpack.c.b16 %v935, %v931
        %v1036 = vpack.c.b16 %v936, %v932
        %v1037 = vpack.c.b16 %v937, %v933
        %v1038 = vpack.c.b16 %v942, %v938
        %v1039 = vpack.c.b16 %v943, %v939
        %v1040 = vpack.c.b16 %v944, %v940
        %v1041 = vpack.c.b16 %v945, %v941
        %1138 = vmatpush.bf16.msra.mxu0 %v974
        %1139 = vmatpush.bf16.msra.mxu0 %v970
        %1140 = vmatpush.bf16.msra.mxu0 %v966
        %1141 = vmatpush.bf16.msra.mxu0 %v962
        %1142 = vmatpush.bf16.msra.mxu0 %v958
        %1143 = vmatpush.bf16.msra.mxu0 %v954
        %1144 = vmatpush.bf16.msra.mxu0 %v950
        %1145 = vmatpush.bf16.msra.mxu0 %v946
        %1146 = vmatmul.bf16.gmra.mxu0 %v652
        %v1147 = vpop.f32.mrf.mxu0
        %v1148 = vadd.f32 %v634, %v1147
        %v1149 = vpop.f32.mrf.mxu0
        %v1150 = vadd.f32 %v634, %v1149
        %1151 = vdwg.mxu0
        %1152 = vmatpush.bf16.msra.mxu0 %v1006
        %1153 = vmatpush.bf16.msra.mxu0 %v1002
        %1154 = vmatpush.bf16.msra.mxu0 %v998
        %1155 = vmatpush.bf16.msra.mxu0 %v994
        %1156 = vmatpush.bf16.msra.mxu0 %v990
        %1157 = vmatpush.bf16.msra.mxu0 %v986
        %1158 = vmatpush.bf16.msra.mxu0 %v982
        %1159 = vmatpush.bf16.msra.mxu0 %v978
        %1160 = vmatmul.bf16.gmra.mxu0 %v653
        %v1161 = vpop.f32.mrf.mxu0
        %v1162 = vadd.f32 %v1148, %v1161
        %v1163 = vpop.f32.mrf.mxu0
        %v1164 = vadd.f32 %v1150, %v1163
        %1165 = vdwg.mxu0
        %1166 = vmatpush.bf16.msra.mxu0 %v1038
        %1167 = vmatpush.bf16.msra.mxu0 %v1034
        %1168 = vmatpush.bf16.msra.mxu0 %v1030
        %1169 = vmatpush.bf16.msra.mxu0 %v1026
        %1170 = vmatpush.bf16.msra.mxu0 %v1022
        %1171 = vmatpush.bf16.msra.mxu0 %v1018
        %1172 = vmatpush.bf16.msra.mxu0 %v1014
        %1173 = vmatpush.bf16.msra.mxu0 %v1010
        %1174 = vmatmul.bf16.gmra.mxu0 %v654
        %v1175 = vpop.f32.mrf.mxu0
        %v1176 = vadd.f32 %v1162, %v1175
        %v1177 = vpop.f32.mrf.mxu0
        %v1178 = vadd.f32 %v1164, %v1177
        %1179 = vdwg.mxu0
        %1180 = vmatpush.bf16.msra.mxu0 %v975
        %1181 = vmatpush.bf16.msra.mxu0 %v971
        %1182 = vmatpush.bf16.msra.mxu0 %v967
        %1183 = vmatpush.bf16.msra.mxu0 %v963
        %1184 = vmatpush.bf16.msra.mxu0 %v959
        %1185 = vmatpush.bf16.msra.mxu0 %v955
        %1186 = vmatpush.bf16.msra.mxu0 %v951
        %1187 = vmatpush.bf16.msra.mxu0 %v947
        %1188 = vmatmul.bf16.gmra.mxu0 %v652
        %v1189 = vpop.f32.mrf.mxu0
        %v1190 = vadd.f32 %v635, %v1189
        %v1191 = vpop.f32.mrf.mxu0
        %v1192 = vadd.f32 %v635, %v1191
        %1193 = vdwg.mxu0
        %1194 = vmatpush.bf16.msra.mxu0 %v1007
        %1195 = vmatpush.bf16.msra.mxu0 %v1003
        %1196 = vmatpush.bf16.msra.mxu0 %v999
        %1197 = vmatpush.bf16.msra.mxu0 %v995
        %1198 = vmatpush.bf16.msra.mxu0 %v991
        %1199 = vmatpush.bf16.msra.mxu0 %v987
        %1200 = vmatpush.bf16.msra.mxu0 %v983
        %1201 = vmatpush.bf16.msra.mxu0 %v979
        %1202 = vmatmul.bf16.gmra.mxu0 %v653
        %v1203 = vpop.f32.mrf.mxu0
        %v1204 = vadd.f32 %v1190, %v1203
        %v1205 = vpop.f32.mrf.mxu0
        %v1206 = vadd.f32 %v1192, %v1205
        %1207 = vdwg.mxu0
        %1208 = vmatpush.bf16.msra.mxu0 %v1039
        %1209 = vmatpush.bf16.msra.mxu0 %v1035
        %1210 = vmatpush.bf16.msra.mxu0 %v1031
        %1211 = vmatpush.bf16.msra.mxu0 %v1027
        %1212 = vmatpush.bf16.msra.mxu0 %v1023
        %1213 = vmatpush.bf16.msra.mxu0 %v1019
        %1214 = vmatpush.bf16.msra.mxu0 %v1015
        %1215 = vmatpush.bf16.msra.mxu0 %v1011
        %1216 = vmatmul.bf16.gmra.mxu0 %v654
        %v1217 = vpop.f32.mrf.mxu0
        %v1218 = vadd.f32 %v1204, %v1217
        %v1219 = vpop.f32.mrf.mxu0
        %v1220 = vadd.f32 %v1206, %v1219
        %1221 = vdwg.mxu0
        %1222 = vmatpush.bf16.msra.mxu0 %v976
        %1223 = vmatpush.bf16.msra.mxu0 %v972
        %1224 = vmatpush.bf16.msra.mxu0 %v968
        %1225 = vmatpush.bf16.msra.mxu0 %v964
        %1226 = vmatpush.bf16.msra.mxu0 %v960
        %1227 = vmatpush.bf16.msra.mxu0 %v956
        %1228 = vmatpush.bf16.msra.mxu0 %v952
        %1229 = vmatpush.bf16.msra.mxu0 %v948
        %1230 = vmatmul.bf16.gmra.mxu0 %v652
        %v1231 = vpop.f32.mrf.mxu0
        %v1232 = vadd.f32 %v636, %v1231
        %v1233 = vpop.f32.mrf.mxu0
        %v1234 = vadd.f32 %v636, %v1233
        %1235 = vdwg.mxu0
        %1236 = vmatpush.bf16.msra.mxu0 %v1008
        %1237 = vmatpush.bf16.msra.mxu0 %v1004
        %1238 = vmatpush.bf16.msra.mxu0 %v1000
        %1239 = vmatpush.bf16.msra.mxu0 %v996
        %1240 = vmatpush.bf16.msra.mxu0 %v992
        %1241 = vmatpush.bf16.msra.mxu0 %v988
        %1242 = vmatpush.bf16.msra.mxu0 %v984
        %1243 = vmatpush.bf16.msra.mxu0 %v980
        %1244 = vmatmul.bf16.gmra.mxu0 %v653
        %v1245 = vpop.f32.mrf.mxu0
        %v1246 = vadd.f32 %v1232, %v1245
        %v1247 = vpop.f32.mrf.mxu0
        %v1248 = vadd.f32 %v1234, %v1247
        %1249 = vdwg.mxu0
        %1250 = vmatpush.bf16.msra.mxu0 %v1040
        %1251 = vmatpush.bf16.msra.mxu0 %v1036
        %1252 = vmatpush.bf16.msra.mxu0 %v1032
        %1253 = vmatpush.bf16.msra.mxu0 %v1028
        %1254 = vmatpush.bf16.msra.mxu0 %v1024
        %1255 = vmatpush.bf16.msra.mxu0 %v1020
        %1256 = vmatpush.bf16.msra.mxu0 %v1016
        %1257 = vmatpush.bf16.msra.mxu0 %v1012
        %1258 = vmatmul.bf16.gmra.mxu0 %v654
        %v1259 = vpop.f32.mrf.mxu0
        %v1260 = vadd.f32 %v1246, %v1259
        %v1261 = vpop.f32.mrf.mxu0
        %v1262 = vadd.f32 %v1248, %v1261
        %1263 = vdwg.mxu0
        %1264 = vmatpush.bf16.msra.mxu0 %v977
        %1265 = vmatpush.bf16.msra.mxu0 %v973
        %1266 = vmatpush.bf16.msra.mxu0 %v969
        %1267 = vmatpush.bf16.msra.mxu0 %v965
        %1268 = vmatpush.bf16.msra.mxu0 %v961
        %1269 = vmatpush.bf16.msra.mxu0 %v957
        %1270 = vmatpush.bf16.msra.mxu0 %v953
        %1271 = vmatpush.bf16.msra.mxu0 %v949
        %1272 = vmatmul.bf16.gmra.mxu0 %v652
        %v1273 = vpop.f32.mrf.mxu0
        %v1274 = vadd.f32 %v637, %v1273
        %v1275 = vpop.f32.mrf.mxu0
        %v1276 = vadd.f32 %v637, %v1275
        %1277 = vdwg.mxu0
        %1278 = vmatpush.bf16.msra.mxu0 %v1009
        %1279 = vmatpush.bf16.msra.mxu0 %v1005
        %1280 = vmatpush.bf16.msra.mxu0 %v1001
        %1281 = vmatpush.bf16.msra.mxu0 %v997
        %1282 = vmatpush.bf16.msra.mxu0 %v993
        %1283 = vmatpush.bf16.msra.mxu0 %v989
        %1284 = vmatpush.bf16.msra.mxu0 %v985
        %1285 = vmatpush.bf16.msra.mxu0 %v981
        %1286 = vmatmul.bf16.gmra.mxu0 %v653
        %v1287 = vpop.f32.mrf.mxu0
        %v1288 = vadd.f32 %v1274, %v1287
        %v1289 = vpop.f32.mrf.mxu0
        %v1290 = vadd.f32 %v1276, %v1289
        %1291 = vdwg.mxu0
        %1292 = vmatpush.bf16.msra.mxu0 %v1041
        %1293 = vmatpush.bf16.msra.mxu0 %v1037
        %1294 = vmatpush.bf16.msra.mxu0 %v1033
        %1295 = vmatpush.bf16.msra.mxu0 %v1029
        %1296 = vmatpush.bf16.msra.mxu0 %v1025
        %1297 = vmatpush.bf16.msra.mxu0 %v1021
        %1298 = vmatpush.bf16.msra.mxu0 %v1017
        %1299 = vmatpush.bf16.msra.mxu0 %v1013
        %1300 = vmatmul.bf16.gmra.mxu0 %v654
        %v1301 = vpop.f32.mrf.mxu0
        %v1302 = vadd.f32 %v1288, %v1301
        %v1303 = vpop.f32.mrf.mxu0
        %v1304 = vadd.f32 %v1290, %v1303
        %1305 = vdwg.mxu0
        %v1306 = vmax.f32 %v1176, 0.0
        %v1307 = vmax.f32 %v1218, 0.0
        %v1308 = vmax.f32 %v1260, 0.0
        %v1309 = vmax.f32 %v1302, 0.0
        %v1310 = vmax.f32 %v1178, 0.0
        %v1311 = vmax.f32 %v1220, 0.0
        %v1312 = vmax.f32 %v1262, 0.0
        %v1313 = vmax.f32 %v1304, 0.0
        %v1314 = vpack.c.bf16 %v1307, %v1306
        %v1315 = vpack.c.bf16 %v1309, %v1308
        %v1316 = vpack.c.bf16 %v1311, %v1310
        %v1317 = vpack.c.bf16 %v1313, %v1312
        %1318 = vst [vmem:[%s491] sm:$0xff] %v1314
        %1319 = vst [vmem:[%s491 + $0x8] sm:$0xff] %v1315
        %1320 = vst [vmem:[%s491 + $0x10] sm:$0xff] %v1316
        %1321 = vst [vmem:[%s491 + $0x18] sm:$0xff] %v1317
        %v1322 = vld [vmem:[%s516] sm:$0xf]
        %v1323 = vld [vmem:[%s516 + $0x4] sm:$0xf]
        %v1324 = vld [vmem:[%s516 + $0x8] sm:$0xf]
        %v1325 = vld [vmem:[%s516 + $0xc] sm:$0xf]
        %v1326 = vld [vmem:[%s516 + $0x10] sm:$0xf]
        %v1327 = vld [vmem:[%s516 + $0x14] sm:$0xf]
        %v1328 = vld [vmem:[%s516 + $0x18] sm:$0xf]
        %v1329 = vld [vmem:[%s516 + $0x1c] sm:$0xf]
        %v1330 = vld [vmem:[%s516 + $0x20] sm:$0xf]
        %v1331 = vld [vmem:[%s516 + $0x24] sm:$0xf]
        %v1332 = vld [vmem:[%s516 + $0x28] sm:$0xf]
        %v1333 = vld [vmem:[%s516 + $0x2c] sm:$0xf]
        %v1334 = vld [vmem:[%s516 + $0x30] sm:$0xf]
        %v1335 = vld [vmem:[%s516 + $0x34] sm:$0xf]
        %v1336 = vld [vmem:[%s516 + $0x38] sm:$0xf]
        %v1337 = vld [vmem:[%s516 + $0x3c] sm:$0xf]
        %v1338 = vld [vmem:[%s516 + $0x40] sm:$0xf]
        %v1339 = vld [vmem:[%s516 + $0x44] sm:$0xf]
        %v1340 = vld [vmem:[%s516 + $0x48] sm:$0xf]
        %v1341 = vld [vmem:[%s516 + $0x4c] sm:$0xf]
        %v1342 = vld [vmem:[%s516 + $0x50] sm:$0xf]
        %v1343 = vld [vmem:[%s516 + $0x54] sm:$0xf]
        %v1344 = vld [vmem:[%s516 + $0x58] sm:$0xf]
        %v1345 = vld [vmem:[%s516 + $0x5c] sm:$0xf]
        %v1346 = vld [vmem:[%s516 + $0x60] sm:$0xf]
        %v1347 = vld [vmem:[%s516 + $0x64] sm:$0xf]
        %v1348 = vld [vmem:[%s516 + $0x68] sm:$0xf]
        %v1349 = vld [vmem:[%s516 + $0x6c] sm:$0xf]
        %v1350 = vld [vmem:[%s516 + $0x70] sm:$0xf]
        %v1351 = vld [vmem:[%s516 + $0x74] sm:$0xf]
        %v1352 = vld [vmem:[%s516 + $0x78] sm:$0xf]
        %v1353 = vld [vmem:[%s516 + $0x7c] sm:$0xf]
        %v1354 = vld [vmem:[%s516 + $0x80] sm:$0xf]
        %v1355 = vld [vmem:[%s516 + $0x84] sm:$0xf]
        %v1356 = vld [vmem:[%s516 + $0x88] sm:$0xf]
        %v1357 = vld [vmem:[%s516 + $0x8c] sm:$0xf]
        %v1358 = vld [vmem:[%s516 + $0x90] sm:$0xf]
        %v1359 = vld [vmem:[%s516 + $0x94] sm:$0xf]
        %v1360 = vld [vmem:[%s516 + $0x98] sm:$0xf]
        %v1361 = vld [vmem:[%s516 + $0x9c] sm:$0xf]
        %v1362 = vld [vmem:[%s516 + $0xa0] sm:$0xf]
        %v1363 = vld [vmem:[%s516 + $0xa4] sm:$0xf]
        %v1364 = vld [vmem:[%s516 + $0xa8] sm:$0xf]
        %v1365 = vld [vmem:[%s516 + $0xac] sm:$0xf]
        %v1366 = vld [vmem:[%s516 + $0xb0] sm:$0xf]
        %v1367 = vld [vmem:[%s516 + $0xb4] sm:$0xf]
        %v1368 = vld [vmem:[%s516 + $0xb8] sm:$0xf]
        %v1369 = vld [vmem:[%s516 + $0xbc] sm:$0xf]
        %v1370 = vld [vmem:[%s516 + $0xc0] sm:$0xf]
        %v1371 = vld [vmem:[%s516 + $0xc4] sm:$0xf]
        %v1372 = vld [vmem:[%s516 + $0xc8] sm:$0xf]
        %v1373 = vld [vmem:[%s516 + $0xcc] sm:$0xf]
        %v1374 = vld [vmem:[%s516 + $0xd0] sm:$0xf]
        %v1375 = vld [vmem:[%s516 + $0xd4] sm:$0xf]
        %v1376 = vld [vmem:[%s516 + $0xd8] sm:$0xf]
        %v1377 = vld [vmem:[%s516 + $0xdc] sm:$0xf]
        %v1378 = vld [vmem:[%s516 + $0xe0] sm:$0xf]
        %v1379 = vld [vmem:[%s516 + $0xe4] sm:$0xf]
        %v1380 = vld [vmem:[%s516 + $0xe8] sm:$0xf]
        %v1381 = vld [vmem:[%s516 + $0xec] sm:$0xf]
        %v1382 = vld [vmem:[%s516 + $0xf0] sm:$0xf]
        %v1383 = vld [vmem:[%s516 + $0xf4] sm:$0xf]
        %v1384 = vld [vmem:[%s516 + $0xf8] sm:$0xf]
        %v1385 = vld [vmem:[%s516 + $0xfc] sm:$0xf]
        %v1386 = vmul.f32 %v1306, %v1306
        %v1387 = vmul.f32 %v1307, %v1307
        %v1388 = vmul.f32 %v1308, %v1308
        %v1389 = vmul.f32 %v1309, %v1309
        %v1390 = vmul.f32 %v1310, %v1310
        %v1391 = vmul.f32 %v1311, %v1311
        %v1392 = vmul.f32 %v1312, %v1312
        %v1393 = vmul.f32 %v1313, %v1313
        %v1394 = vadd.f32 %v1386, %v1387
        %v1395 = vadd.f32 %v1394, %v1388
        %v1396 = vadd.f32 %v1395, %v1389
        %1397 = vadd.xlane.f32.xlu0 %v1396
        %v1398 = vpop.xlane.xlu0 %1397
        %v1399 = vadd.f32 %v1390, %v1391
        %v1400 = vadd.f32 %v1399, %v1392
        %v1401 = vadd.f32 %v1400, %v1393
        %1402 = vadd.xlane.f32.xlu0 %v1401
        %v1403 = vpop.xlane.xlu0 %1402
        %v1404 = vlaneseq
        %v1405 = vand.u32 %v1404, 127
        %v1406 = vld [vmem:[%s524] sm:$0xff]
        %v1407 = vld [vmem:[%s524 + $0x8] sm:$0xff]
        %vm1408 = vcmp.eq.s32.totalorder %v1405, 8
        %v1409 = vsel %vm1408, %v1398, 0.0
        %v1410 = vsel %vm1408, %v1403, 0.0
        %v1415 = vunpack.c.l.b16 %v1314
        %v1416 = vunpack.c.h.b16 %v1314
        %v1417 = vunpack.c.l.b16 %v1315
        %v1418 = vunpack.c.h.b16 %v1315
        %v1419 = vunpack.c.l.b16 %v1316
        %v1420 = vunpack.c.h.b16 %v1316
        %v1421 = vunpack.c.l.b16 %v1317
        %v1422 = vunpack.c.h.b16 %v1317
        %v1423 = vpack.c.b16 %v1419, %v1415
        %v1424 = vpack.c.b16 %v1420, %v1416
        %v1425 = vpack.c.b16 %v1421, %v1417
        %v1426 = vpack.c.b16 %v1422, %v1418
        %v1495 = vunpack.c.l.b16 %v1322
        %v1496 = vunpack.c.l.b16 %v1323
        %v1497 = vunpack.c.l.b16 %v1324
        %v1498 = vunpack.c.l.b16 %v1325
        %v1499 = vunpack.c.l.b16 %v1326
        %v1500 = vunpack.c.l.b16 %v1327
        %v1501 = vunpack.c.l.b16 %v1328
        %v1502 = vunpack.c.l.b16 %v1329
        %v1503 = vunpack.c.l.b16 %v1330
        %v1504 = vunpack.c.l.b16 %v1331
        %v1505 = vunpack.c.l.b16 %v1332
        %v1506 = vunpack.c.l.b16 %v1333
        %v1507 = vunpack.c.l.b16 %v1334
        %v1508 = vunpack.c.l.b16 %v1335
        %v1509 = vunpack.c.l.b16 %v1336
        %v1510 = vunpack.c.l.b16 %v1337
        %v1511 = vunpack.c.l.b16 %v1338
        %v1512 = vunpack.c.l.b16 %v1339
        %v1513 = vunpack.c.l.b16 %v1340
        %v1514 = vunpack.c.l.b16 %v1341
        %v1515 = vunpack.c.l.b16 %v1342
        %v1516 = vunpack.c.l.b16 %v1343
        %v1517 = vunpack.c.l.b16 %v1344
        %v1518 = vunpack.c.l.b16 %v1345
        %v1519 = vunpack.c.l.b16 %v1346
        %v1520 = vunpack.c.l.b16 %v1347
        %v1521 = vunpack.c.l.b16 %v1348
        %v1522 = vunpack.c.l.b16 %v1349
        %v1523 = vunpack.c.l.b16 %v1350
        %v1524 = vunpack.c.l.b16 %v1351
        %v1525 = vunpack.c.l.b16 %v1352
        %v1526 = vunpack.c.l.b16 %v1353
        %v1527 = vunpack.c.l.b16 %v1354
        %v1528 = vunpack.c.l.b16 %v1355
        %v1529 = vunpack.c.l.b16 %v1356
        %v1530 = vunpack.c.l.b16 %v1357
        %v1531 = vunpack.c.l.b16 %v1358
        %v1532 = vunpack.c.l.b16 %v1359
        %v1533 = vunpack.c.l.b16 %v1360
        %v1534 = vunpack.c.l.b16 %v1361
        %v1535 = vunpack.c.l.b16 %v1362
        %v1536 = vunpack.c.l.b16 %v1363
        %v1537 = vunpack.c.l.b16 %v1364
        %v1538 = vunpack.c.l.b16 %v1365
        %v1539 = vunpack.c.l.b16 %v1366
        %v1540 = vunpack.c.l.b16 %v1367
        %v1541 = vunpack.c.l.b16 %v1368
        %v1542 = vunpack.c.l.b16 %v1369
        %v1543 = vunpack.c.l.b16 %v1370
        %v1544 = vunpack.c.l.b16 %v1371
        %v1545 = vunpack.c.l.b16 %v1372
        %v1546 = vunpack.c.l.b16 %v1373
        %v1547 = vunpack.c.l.b16 %v1374
        %v1548 = vunpack.c.l.b16 %v1375
        %v1549 = vunpack.c.l.b16 %v1376
        %v1550 = vunpack.c.l.b16 %v1377
        %v1551 = vunpack.c.l.b16 %v1378
        %v1552 = vunpack.c.l.b16 %v1379
        %v1553 = vunpack.c.l.b16 %v1380
        %v1554 = vunpack.c.l.b16 %v1381
        %v1555 = vunpack.c.l.b16 %v1382
        %v1556 = vunpack.c.l.b16 %v1383
        %v1557 = vunpack.c.l.b16 %v1384
        %v1558 = vunpack.c.l.b16 %v1385
        %v1559 = vpack.c.b16 %v1496, %v1495
        %v1560 = vpack.c.b16 %v1498, %v1497
        %v1561 = vpack.c.b16 %v1500, %v1499
        %v1562 = vpack.c.b16 %v1502, %v1501
        %v1563 = vpack.c.b16 %v1504, %v1503
        %v1564 = vpack.c.b16 %v1506, %v1505
        %v1565 = vpack.c.b16 %v1508, %v1507
        %v1566 = vpack.c.b16 %v1510, %v1509
        %v1567 = vpack.c.b16 %v1512, %v1511
        %v1568 = vpack.c.b16 %v1514, %v1513
        %v1569 = vpack.c.b16 %v1516, %v1515
        %v1570 = vpack.c.b16 %v1518, %v1517
        %v1571 = vpack.c.b16 %v1520, %v1519
        %v1572 = vpack.c.b16 %v1522, %v1521
        %v1573 = vpack.c.b16 %v1524, %v1523
        %v1574 = vpack.c.b16 %v1526, %v1525
        %v1575 = vpack.c.b16 %v1528, %v1527
        %v1576 = vpack.c.b16 %v1530, %v1529
        %v1577 = vpack.c.b16 %v1532, %v1531
        %v1578 = vpack.c.b16 %v1534, %v1533
        %v1579 = vpack.c.b16 %v1536, %v1535
        %v1580 = vpack.c.b16 %v1538, %v1537
        %v1581 = vpack.c.b16 %v1540, %v1539
        %v1582 = vpack.c.b16 %v1542, %v1541
        %v1583 = vpack.c.b16 %v1544, %v1543
        %v1584 = vpack.c.b16 %v1546, %v1545
        %v1585 = vpack.c.b16 %v1548, %v1547
        %v1586 = vpack.c.b16 %v1550, %v1549
        %v1587 = vpack.c.b16 %v1552, %v1551
        %v1588 = vpack.c.b16 %v1554, %v1553
        %v1589 = vpack.c.b16 %v1556, %v1555
        %v1590 = vpack.c.b16 %v1558, %v1557
        %1623 = vmatpush.bf16.msra.mxu0 %v1566
        %1624 = vmatpush.bf16.msra.mxu0 %v1565
        %1625 = vmatpush.bf16.msra.mxu0 %v1564
        %1626 = vmatpush.bf16.msra.mxu0 %v1563
        %1627 = vmatpush.bf16.msra.mxu0 %v1562
        %1628 = vmatpush.bf16.msra.mxu0 %v1561
        %1629 = vmatpush.bf16.msra.mxu0 %v1560
        %1630 = vmatpush.bf16.msra.mxu0 %v1559
        %1631 = vmatmul.bf16.gmra.mxu0 %v1423
        %v1632 = vpop.f32.mrf.mxu0
        %v1633 = vadd.f32 %v1409, %v1632
        %v1634 = vpop.f32.mrf.mxu0
        %v1635 = vadd.f32 %v1410, %v1634
        %1636 = vdwg.mxu0
        %1637 = vmatpush.bf16.msra.mxu0 %v1574
        %1638 = vmatpush.bf16.msra.mxu0 %v1573
        %1639 = vmatpush.bf16.msra.mxu0 %v1572
        %1640 = vmatpush.bf16.msra.mxu0 %v1571
        %1641 = vmatpush.bf16.msra.mxu0 %v1570
        %1642 = vmatpush.bf16.msra.mxu0 %v1569
        %1643 = vmatpush.bf16.msra.mxu0 %v1568
        %1644 = vmatpush.bf16.msra.mxu0 %v1567
        %1645 = vmatmul.bf16.gmra.mxu0 %v1424
        %v1646 = vpop.f32.mrf.mxu0
        %v1647 = vadd.f32 %v1633, %v1646
        %v1648 = vpop.f32.mrf.mxu0
        %v1649 = vadd.f32 %v1635, %v1648
        %1650 = vdwg.mxu0
        %1651 = vmatpush.bf16.msra.mxu0 %v1582
        %1652 = vmatpush.bf16.msra.mxu0 %v1581
        %1653 = vmatpush.bf16.msra.mxu0 %v1580
        %1654 = vmatpush.bf16.msra.mxu0 %v1579
        %1655 = vmatpush.bf16.msra.mxu0 %v1578
        %1656 = vmatpush.bf16.msra.mxu0 %v1577
        %1657 = vmatpush.bf16.msra.mxu0 %v1576
        %1658 = vmatpush.bf16.msra.mxu0 %v1575
        %1659 = vmatmul.bf16.gmra.mxu0 %v1425
        %v1660 = vpop.f32.mrf.mxu0
        %v1661 = vadd.f32 %v1647, %v1660
        %v1662 = vpop.f32.mrf.mxu0
        %v1663 = vadd.f32 %v1649, %v1662
        %1664 = vdwg.mxu0
        %1665 = vmatpush.bf16.msra.mxu0 %v1590
        %1666 = vmatpush.bf16.msra.mxu0 %v1589
        %1667 = vmatpush.bf16.msra.mxu0 %v1588
        %1668 = vmatpush.bf16.msra.mxu0 %v1587
        %1669 = vmatpush.bf16.msra.mxu0 %v1586
        %1670 = vmatpush.bf16.msra.mxu0 %v1585
        %1671 = vmatpush.bf16.msra.mxu0 %v1584
        %1672 = vmatpush.bf16.msra.mxu0 %v1583
        %1673 = vmatmul.bf16.gmra.mxu0 %v1426
        %v1674 = vpop.f32.mrf.mxu0
        %v1675 = vadd.f32 %v1661, %v1674
        %v1676 = vpop.f32.mrf.mxu0
        %v1677 = vadd.f32 %v1663, %v1676
        %1678 = vdwg.mxu0
        %v1679 = vadd.f32 %v1406, %v1675
        %v1680 = vadd.f32 %v1407, %v1677
        %1681 = vst [vmem:[%s524] sm:$0xff] %v1679
        %1682 = vst [vmem:[%s524 + $0x8] sm:$0xff] %v1680
        %s1683 = sand.u32 %s143, 1
        %s1684 = sand.u32 %s143, 1
        %s1685 = smul.addr %s1684, 32
        %s1686 = scalar_lea.vmem [#allocation3], %s1685
        %s1687 = smul.u32 2, %s21
        %p1688 = scmp.lt.s32.totalorder %s1687, 3
        %s1689 = scalar_select %p1688, %s1687, 3
        %s1690 = smul.addr %s1689, 8
        %s1691 = scalar_lea.vmem %s5, %s1690
        // Predicated region
        $region64: #{model_forward.1} parent=54 // pred_check
          %p1692 = pneg %p153
        $region65: #{model_forward.1} parent=54 // pred_check_branch
          %1694 = sbr.rel (%p1692) target = $region67
        $region66: #{model_forward.1} parent=54 // pred_region
          %s1695 = smul.u32 2, %s21
          %s1696 = smul.u32 4, %s22
          %s1697 = smul.addr %s1695, 16
          %s1698 = sadd.s32 %s1696, %s1697
          %s1699 = smul.addr %s1698, 4
          %s1700 = scalar_lea.vmem %s4, %s1699
          // Predicated region
          $region68: #{model_forward.1} parent=66 // pred_check
            _
          $region69: #{model_forward.1} parent=66 // pred_check_branch
            %1702 = sbr.rel (0) target = $region71
          $region70: #{model_forward.1} parent=66 // pred_region
            // Predicated region
            $region72: #{model_forward.1} parent=70 // pred_check
              _
            $region73: #{model_forward.1} parent=70 // pred_check_branch
              %1704 = sbr.rel (0) target = $region75
            $region74: #{model_forward.1} parent=70 // pred_region
              loop: start=0, step=1, limit=1
              $region76: #{model_forward.1} parent=74 // loop_pre_header
                _
              $region77: #{model_forward.1} parent=74 // loop_header
                %s1706 = sphi 0, %s1710
                %p1707 = scmp.ge.s32.totalorder %s1706, 1
                %s1711 = sphi %s1686, %s1686
                %s1712 = sphi %s1700, %s1700
              $region78: #{model_forward.1} parent=74 // loop_header_branch
                %1709 = sbr.rel (%p1707) target = $region82
              $region79: #{model_forward.1} parent=74 // loop_body
                %v1713 = vld [vmem:[%s1711] sm:$0xff]
                %1714 = vst [vmem:[%s1712] sm:$0xff] %v1713
                %v1715 = vld [vmem:[%s1711 + $0x8] sm:$0xff]
                %1716 = vst [vmem:[%s1712 + $0x8] sm:$0xff] %v1715
                %v1717 = vld [vmem:[%s1711 + $0x10] sm:$0xff]
                %1718 = vst [vmem:[%s1712 + $0x40] sm:$0xff] %v1717
                %v1719 = vld [vmem:[%s1711 + $0x18] sm:$0xff]
                %1720 = vst [vmem:[%s1712 + $0x48] sm:$0xff] %v1719
              $region80: #{model_forward.1} parent=74 // loop_footer
                %s1710 = sadd.s32 1, %s1706
              $region81: #{model_forward.1} parent=74 // loop_footer_branch
                %1705 = sbr.rel target = $region77
              $region82: #{model_forward.1} parent=74 // loop_exit
                _
            $region75: #{model_forward.1} parent=70 // pred_fallthru
              _
            // Predicated region
            $region83: #{model_forward.1} parent=70 // pred_check
              _
            $region84: #{model_forward.1} parent=70 // pred_check_branch
              %1722 = sbr.rel target = $region86
            $region85: #{model_forward.1} parent=70 // pred_region
              _
            $region86: #{model_forward.1} parent=70 // pred_fallthru
              _
          $region71: #{model_forward.1} parent=66 // pred_fallthru
            _
          %1723 = vnop
        $region67: #{model_forward.1} parent=54 // pred_fallthru
          _
        // Predicated region
        $region87: #{model_forward.1} parent=54 // pred_check
          %p1724 = pneg %p179
        $region88: #{model_forward.1} parent=54 // pred_check_branch
          %1726 = sbr.rel (%p1724) target = $region90
        $region89: #{model_forward.1} parent=54 // pred_region
          %s1727 = smul.u32 2, %s21
        $region90: #{model_forward.1} parent=54 // pred_fallthru
          _
      $region55: #{model_forward.1} parent=5 // pred_fallthru
        _
      %p1728 = scmp.le.s32.totalorder 2, %s12
      // Predicated region
      $region91: #{model_forward.1} parent=5 // pred_check
        %p1729 = pneg %p1728
      $region92: #{model_forward.1} parent=5 // pred_check_branch
        %1731 = sbr.rel (%p1729) target = $region94
      $region93: #{model_forward.1} parent=5 // pred_region
        %s1732 = ssub.s32 %s12, 2
        // Predicated region
        $region95: #{model_forward.1} parent=93 // pred_check
          %p1733 = pneg %p159
        $region96: #{model_forward.1} parent=93 // pred_check_branch
          %1735 = sbr.rel (%p1733) target = $region98
        $region97: #{model_forward.1} parent=93 // pred_region
          %s1736 = sand.u32 %s144, 1
          %s1737 = sand.u32 %s144, 1
          %s1738 = smul.addr %s1737, 32
          %s1739 = scalar_lea.vmem [#allocation3], %s1738
        $region98: #{model_forward.1} parent=93 // pred_fallthru
          _
        // Predicated region
        $region99: #{model_forward.1} parent=93 // pred_check
          %p1740 = pneg %p185
        $region100: #{model_forward.1} parent=93 // pred_check_branch
          %1742 = sbr.rel (%p1740) target = $region102
        $region101: #{model_forward.1} parent=93 // pred_region
          %s1743 = smul.u32 2, %s23
          %p1744 = scmp.lt.s32.totalorder %s1743, 3
          %s1745 = scalar_select %p1744, %s1743, 3
          %s1746 = smul.addr %s1745, 8
          %s1747 = scalar_lea.vmem %s5, %s1746
        $region102: #{model_forward.1} parent=93 // pred_fallthru
          _
      $region94: #{model_forward.1} parent=5 // pred_fallthru
        _
    $region6: #{model_forward.1} parent=1 // loop_footer
      %s16 = sadd.s32 1, %s12
    $region7: #{model_forward.1} parent=1 // loop_footer_branch
      %11 = sbr.rel target = $region3
    $region8: #{model_forward.1} parent=1 // loop_exit
      _

</llo_original>
